<compile_context>
chip_gen: v6e
topology: v6e:2x2x1
jax: 0.10.0
libtpu: 0.0.40
codegen_flags: <defaults>
</compile_context>

<pallas_src>
import math

import numpy as np
import jax
import jax.numpy as jnp
from jax.experimental import pallas as pl
from jax.experimental.pallas import tpu as pltpu

mm = 1e-3
BASE_PLANE_THICKNESS = 2 * mm

_VMEM_LIMIT = 32 * 1024 * 1024      # explicit scoped-VMEM cap (safe on v5e/v6e/v7x)
_MAX_TILE_BYTES = 1 << 20           # 1 MiB per (TR, C) f32 buffer; ~14 live buffers


# ----------------------------------------------------------------------------
# layout helpers
# ----------------------------------------------------------------------------
def _plane_shape(height, width):
    """Lane-dense 2-D view (R, C) of the H*W plane (C a multiple of 128 if possible)."""
    p = height * width
    for c in (1024, 512, 256, 128):
        if p % c == 0:
            return p // c, c
    return height, width            # fallback: native plane (W is the lane dim)


def _row_tile(rows, cols, max_tile_bytes=_MAX_TILE_BYTES):
    """Row tile: full rows, or a multiple of 8 keeping one f32 tile under budget."""
    max_rows = max(8, max_tile_bytes // (cols * 4))
    if rows <= max_rows:
        return rows
    tr = (max_rows // 8) * 8
    t = tr
    while t >= 8:                   # prefer an exact divisor of `rows`
        if rows % t == 0:
            return t
        t -= 8
    return tr                       # non-dividing: grid uses cdiv + masked tail


def _wrap_pm_pi(x):
    """Wrap to [-pi, pi) == mod(x + pi, 2*pi) - pi, via floor (no f32 rem)."""
    pi = jnp.float32(math.pi)
    two_pi = jnp.float32(2.0 * math.pi)
    return x - two_pi * jnp.floor((x + pi) / two_pi)


# ----------------------------------------------------------------------------
# Kernel 1: quantized height map from a phase map (pure VPU)
# ----------------------------------------------------------------------------
def _height_map_kernel(coef_ref, lut_ref, phase_ref, noise_ref, h_ref):
    # coef_ref (SMEM): [design_wavelength / (2*pi*(sqrt(eps)-1))]
    # lut_ref  (SMEM): quantization levels, shape (L,)
    two_pi = jnp.float32(2.0 * math.pi)

    phase = phase_ref[...]                                   # (TR, C) f32
    wrapped = _wrap_pm_pi(phase)                             # wrap to [-pi, pi)

    # argmax of sigmoid(s*d)*(1-sigmoid(s*d)) == argmin |circular diff|
    # (score is even & strictly decreasing in |d|); use -|d|: no EUP ops.
    best_score = jnp.full(phase.shape, -jnp.inf, jnp.float32)
    best_lut = jnp.zeros(phase.shape, jnp.float32)
    for l in range(lut_ref.shape[0]):                        # small static unrolled loop
        lv = lut_ref[l]
        d = _wrap_pm_pi(wrapped - lv)
        score = -jnp.abs(d)
        take = score > best_score                            # strict '>' keeps first max
        best_lut = jnp.where(take, lv, best_lut)
        best_score = jnp.where(take, score, best_score)

    # (best_lut + 2*pi) % (2*pi)  (floor-based, valid for arbitrary LUT values)
    q_phase = best_lut - two_pi * jnp.floor(best_lut / two_pi)
    h_ref[...] = q_phase * coef_ref[0] + noise_ref[...]


def _quantized_height_map(phase_rc, noise_rc, lut, coef):
    R, C = phase_rc.shape
    tr = _row_tile(R, C)
    blk = pl.BlockSpec((tr, C), lambda r: (r, 0))
    return pl.pallas_call(
        _height_map_kernel,
        out_shape=jax.ShapeDtypeStruct((R, C), jnp.float32),
        grid=(pl.cdiv(R, tr),),
        in_specs=[
            pl.BlockSpec(memory_space=pltpu.MemorySpace.SMEM),   # coef
            pl.BlockSpec(memory_space=pltpu.MemorySpace.SMEM),   # lut
            blk,                                                 # phase plane
            blk,                                                 # noise plane
        ],
        out_specs=blk,
        compiler_params=pltpu.CompilerParams(
            dimension_semantics=("parallel",),
            vmem_limit_bytes=_VMEM_LIMIT),
        cost_estimate=pl.CostEstimate(
            flops=int(10 * int(lut.shape[0]) * R * C),
            transcendentals=0,
            bytes_accessed=int(3 * R * C * 4)),
    )(coef, lut, phase_rc, noise_rc)


# ----------------------------------------------------------------------------
# Kernel 2: complex field modulation (phase shift cached across batch)
# ----------------------------------------------------------------------------
def _modulate_kernel(wl_ref, mat_ref, h_ref, mask_ref, fre_ref, fim_ref,
                     ore_ref, oim_ref, psr_ref, psi_ref):
    # grid = (Nw, row_tiles, B); B is innermost so the cached phase shift for a
    # (wavelength, row tile) is reused by every batch iteration.
    # program_id / scalar reads are hoisted OUT of the pl.when body (a
    # program_id inside a cond branch has no lowering on the interpret path).
    w = pl.program_id(0)
    b = pl.program_id(2)
    wavelength = wl_ref[w]

    @pl.when(b == 0)
    def _():
        k = jnp.float32(2.0 * math.pi) / wavelength
        sqrt_eps = mat_ref[0]
        tand = mat_ref[1]
        base = mat_ref[2]
        h = h_ref[...] + base                                # (TR, C)
        loss = jnp.exp(-0.5 * k * h * tand * sqrt_eps)
        theta = k * h * (sqrt_eps - 1.0)
        a = mask_ref[...] * loss                             # fold aperture mask in
        psr_ref[...] = a * jnp.cos(theta)                    # exp(-1j*theta)
        psi_ref[...] = -a * jnp.sin(theta)

    ps_re = psr_ref[...]
    ps_im = psi_ref[...]
    fre = fre_ref[...]
    fim = fim_ref[...]
    ore_ref[...] = fre * ps_re - fim * ps_im
    oim_ref[...] = fre * ps_im + fim * ps_re


def _modulate(height_rc, mask_rc, f_re, f_im, wavelengths, mat):
    B, Nw, R, C = f_re.shape
    tr = _row_tile(R, C)
    nr = pl.cdiv(R, tr)

    plane_blk = pl.BlockSpec((tr, C), lambda w, r, b: (r, 0))
    field_blk = pl.BlockSpec((None, None, tr, C), lambda w, r, b: (b, w, r, 0))

    return pl.pallas_call(
        _modulate_kernel,
        out_shape=(jax.ShapeDtypeStruct((B, Nw, R, C), jnp.float32),
                   jax.ShapeDtypeStruct((B, Nw, R, C), jnp.float32)),
        grid=(Nw, nr, B),
        in_specs=[
            pl.BlockSpec(memory_space=pltpu.MemorySpace.SMEM),   # wavelengths
            pl.BlockSpec(memory_space=pltpu.MemorySpace.SMEM),   # material scalars
            plane_blk,                                           # height map
            plane_blk,                                           # aperture mask
            field_blk,                                           # field real
            field_blk,                                           # field imag
        ],
        out_specs=(field_blk, field_blk),
        scratch_shapes=[pltpu.VMEM((tr, C), jnp.float32),        # cached ps_re
                        pltpu.VMEM((tr, C), jnp.float32)],       # cached ps_im
        compiler_params=pltpu.CompilerParams(
            dimension_semantics=("parallel", "parallel", "arbitrary"),
            vmem_limit_bytes=_VMEM_LIMIT),
        cost_estimate=pl.CostEstimate(
            flops=int(6 * B * Nw * R * C + 10 * Nw * R * C),
            transcendentals=int(3 * Nw * R * C),
            bytes_accessed=int(4 * R * C * (4 * B * Nw + 4))),
    )(wavelengths, mat, height_rc, mask_rc, f_re, f_im)


# ----------------------------------------------------------------------------
# fused, jitted forward
# ----------------------------------------------------------------------------
@jax.jit
def _hologram_forward(field_data, phase_rc, lut, wavelengths, mask_rc,
                      noise_rc, mat, coef):
    B, Nw, H, W = field_data.shape
    R, C = phase_rc.shape

    height_rc = _quantized_height_map(phase_rc, noise_rc, lut, coef)

    f = field_data.reshape(B, Nw, R, C)
    # TODO(synk): bitcast complex64 -> interleaved f32 handled inside the kernel
    # would remove the real/imag split + complex rebuild HBM passes entirely.
    f_re = jnp.real(f).astype(jnp.float32)
    f_im = jnp.imag(f).astype(jnp.float32)

    out_re, out_im = _modulate(height_rc, mask_rc, f_re, f_im,
                               wavelengths.astype(jnp.float32), mat)
    return jax.lax.complex(out_re, out_im).reshape(B, Nw, H, W)


# ----------------------------------------------------------------------------
# Python wrapper mirroring PhaseHologramElement
# ----------------------------------------------------------------------------
class PhaseHologramElementPallas:
    def __init__(self, phase_map, holo_level=6, look_up_table=None,
                 tolerance=0.1 * mm, material=(3.0, 0.002), circ_aperture=True):
        self.phase_map = jnp.asarray(phase_map, jnp.float32)          # (1, 1, H, W)
        if look_up_table is None:
            lut = jnp.linspace(-math.pi, math.pi, holo_level + 1,
                               dtype=jnp.float32)[:-1]
        else:
            lut = jnp.asarray(look_up_table, jnp.float32)
        self.lut = lut
        self.holo_level = int(lut.shape[0])
        self.tolerance = float(tolerance)
        assert float(material[0]) > 1.0, \
            "relative permittivity must be > 1 (phase->height divides by sqrt(eps)-1)"
        self.epsilon = jnp.float32(material[0])
        self.tand = jnp.float32(material[1])
        self.circ_aperture = circ_aperture
        self.c_s = 300.0
        self.tau_max = 5.5
        self.tau_min = 5.5

    def _coef(self, wavelengths):
        design_wl = jnp.min(wavelengths.astype(jnp.float32))
        return (design_wl / (2.0 * math.pi)
                / (jnp.sqrt(self.epsilon) - 1.0)).reshape(1).astype(jnp.float32)

    # ---- quantized height map (parity with preprocessed_height_map) ----
    def preprocessed_height_map(self, wavelengths):
        H, W = self.phase_map.shape[2], self.phase_map.shape[3]
        R, C = _plane_shape(H, W)
        phase_rc = self.phase_map[0, 0].reshape(R, C)
        zeros = jnp.zeros((R, C), jnp.float32)
        h = _quantized_height_map(phase_rc, zeros, self.lut, self._coef(wavelengths))
        return h.reshape(H, W)

    # ---- rectangular aperture (matches add_rect_aperture_to_field) ----
    def _rect_aperture_mask(self, spacing, height, width,
                            rect_width=80 * mm, rect_height=80 * mm):
        dx, dy = spacing
        rect_width = min(rect_width, float(dx) * width)
        rect_height = min(rect_height, float(dy) * height)
        x = jnp.linspace(-dx * width / 2, dx * width / 2, width, dtype=jnp.float32)
        y = jnp.linspace(-dy * height / 2, dy * height / 2, height, dtype=jnp.float32)
        X, Y = jnp.meshgrid(x, y, indexing='xy')                       # (H, W)
        mask = (jnp.abs(X) <= rect_width / 2) & (jnp.abs(Y) <= rect_height / 2)
        return mask.astype(jnp.float32)

    # ---- forward == modulate(preprocessed_height_map(...)) ----
    def forward(self, field_data, wavelengths, spacing, noise_key=None):
        B, Nw, H, W = field_data.shape
        PH, PW = self.phase_map.shape[2], self.phase_map.shape[3]
        # TODO(synk): nearest-neighbor upsample when field H/W != phase_map H/W
        assert (H, W) == (PH, PW)

        R, C = _plane_shape(H, W)
        phase_rc = self.phase_map[0, 0].reshape(R, C)

        if noise_key is not None:   # add_height_map_noise: uniform in [-tol, tol]
            noise = (jax.random.uniform(noise_key, (H, W), jnp.float32) - 0.5) \
                * (2.0 * self.tolerance)
        else:
            noise = jnp.zeros((H, W), jnp.float32)
        noise_rc = noise.reshape(R, C)

        if self.circ_aperture:
            mask = self._rect_aperture_mask(spacing, H, W)
        else:
            mask = jnp.ones((H, W), jnp.float32)
        mask_rc = mask.reshape(R, C)

        mat = jnp.stack([jnp.sqrt(self.epsilon), self.tand,
                         jnp.float32(BASE_PLANE_THICKNESS)]).astype(jnp.float32)

        return _hologram_forward(field_data, phase_rc, self.lut,
                                 wavelengths.astype(jnp.float32), mask_rc,
                                 noise_rc, mat, self._coef(wavelengths))


# ----------------------------------------------------------------------------
# main
# ----------------------------------------------------------------------------
if __name__ == "__main__":
    key = jax.random.PRNGKey(0)
    k_phase, k_re, k_im, k_noise = jax.random.split(key, 4)

    B, Nw, H, W = 2, 3, 16, 16
    phase_map = jax.random.uniform(k_phase, (1, 1, H, W), jnp.float32,
                                   minval=-1.5 * math.pi, maxval=1.5 * math.pi)
    wavelengths = jnp.array([3.0 * mm, 4.0 * mm, 5.0 * mm], jnp.float32)
    spacing = (1.0 * mm, 1.0 * mm)
    material = (3.0, 0.002)                       # (relative permittivity, loss tangent)
    tolerance = 0.1 * mm

    field_re = jax.random.normal(k_re, (B, Nw, H, W), jnp.float32)
    field_im = jax.random.normal(k_im, (B, Nw, H, W), jnp.float32)
    field_data = (field_re + 1j * field_im).astype(jnp.complex64)

    holo = PhaseHologramElementPallas(phase_map, holo_level=6,
                                      tolerance=tolerance, material=material,
                                      circ_aperture=True)
    out = holo.forward(field_data, wavelengths, spacing, noise_key=k_noise)
    out = jax.block_until_ready(out)

    # ---- pure-JAX reference (same math as the PyTorch forward, sigmoid scoring) ----
    pi = jnp.float32(math.pi)
    two_pi = 2.0 * pi
    lut = holo.lut
    wrapped = jnp.mod(phase_map + pi, two_pi) - pi
    diff = wrapped - lut[None, :, None, None]
    diff = (jnp.mod(diff + pi, two_pi) - pi) / pi
    s = holo.tau_max / holo.tau_min
    sig = jax.nn.sigmoid(s * diff)
    scores = sig * (1.0 - sig) * 4.0 * holo.c_s * s
    idx = jnp.argmax(jax.nn.softmax(scores, axis=1), axis=1)          # (1, H, W)
    q_phase = jnp.mod(lut[idx] + two_pi, two_pi)                      # (1, H, W)
    design_wl = jnp.min(wavelengths)
    sqrt_eps = jnp.sqrt(jnp.float32(material[0]))
    h_ref = (q_phase / (two_pi / design_wl) / (sqrt_eps - 1.0))[0]
    noise = (jax.random.uniform(k_noise, (H, W), jnp.float32) - 0.5) * 2.0 \
        * jnp.float32(tolerance)
    h_ref = h_ref + noise
    kvec = two_pi / wavelengths
    hh = h_ref[None] + jnp.float32(BASE_PLANE_THICKNESS)
    loss = jnp.exp(-0.5 * kvec[:, None, None] * hh * jnp.float32(material[1]) * sqrt_eps)
    ps = loss * jnp.exp(-1j * kvec[:, None, None] * hh * (sqrt_eps - 1.0))
    mask = holo._rect_aperture_mask(spacing, H, W)
    ref = mask[None, None] * field_data * ps[None]

    assert out.shape == (B, Nw, H, W) and out.dtype == jnp.complex64
    assert np.allclose(np.asarray(out), np.asarray(ref), rtol=1e-3, atol=1e-4)

    print("KERNEL_OK")
</pallas_src>

<mosaic_0001>
module attributes {stable_mosaic.version = 11 : i64} {
  func.func @_height_map_kernel(%arg0: i32, %arg1: memref<1xf32, #tpu.memory_space<smem>>, %arg2: memref<6xf32, #tpu.memory_space<smem>>, %arg3: memref<1x256xf32, #tpu.memory_space<vmem>>, %arg4: memref<1x256xf32, #tpu.memory_space<vmem>>, %arg5: memref<1x256xf32, #tpu.memory_space<vmem>>) attributes {dimension_semantics = [#tpu.dimension_semantics<parallel>], iteration_bounds = array<i64: 1>, scalar_prefetch = 0 : i64, scratch_operands = 0 : i64, tpu.core_type = #tpu.core_type<tc>, window_params = [{transform_indices = @transform_0, window_bounds = array<i64: 1>}, {transform_indices = @transform_1, window_bounds = array<i64: 6>}, {transform_indices = @transform_2, window_bounds = array<i64: 1, 256>}, {transform_indices = @transform_3, window_bounds = array<i64: 1, 256>}, {transform_indices = @transform_4, window_bounds = array<i64: 1, 256>}]} {
    %c0 = arith.constant 0 : index
    %c0_0 = arith.constant 0 : index
    %0 = vector.load %arg3[%c0, %c0_0] : memref<1x256xf32, #tpu.memory_space<vmem>>, vector<1x256xf32>
    %cst = arith.constant 3.14159274 : f32
    %1 = vector.broadcast %cst : f32 to vector<1x256xf32>
    %2 = arith.addf %0, %1 : vector<1x256xf32>
    %cst_1 = arith.constant 6.28318548 : f32
    %3 = vector.broadcast %cst_1 : f32 to vector<1x256xf32>
    %4 = arith.divf %2, %3 : vector<1x256xf32>
    %5 = math.floor %4 : vector<1x256xf32>
    %cst_2 = arith.constant 6.28318548 : f32
    %6 = vector.broadcast %cst_2 : f32 to vector<1x256xf32>
    %7 = arith.mulf %6, %5 : vector<1x256xf32>
    %8 = arith.subf %0, %7 : vector<1x256xf32>
    %cst_3 = arith.constant 0xFF800000 : f32
    %9 = vector.broadcast %cst_3 : f32 to vector<1x256xf32>
    %cst_4 = arith.constant 0.000000e+00 : f32
    %10 = vector.broadcast %cst_4 : f32 to vector<1x256xf32>
    %c0_5 = arith.constant 0 : index
    %11 = memref.load %arg2[%c0_5] : memref<6xf32, #tpu.memory_space<smem>>
    %12 = vector.broadcast %11 : f32 to vector<1x256xf32>
    %13 = arith.subf %8, %12 : vector<1x256xf32>
    %cst_6 = arith.constant 3.14159274 : f32
    %14 = vector.broadcast %cst_6 : f32 to vector<1x256xf32>
    %15 = arith.addf %13, %14 : vector<1x256xf32>
    %cst_7 = arith.constant 6.28318548 : f32
    %16 = vector.broadcast %cst_7 : f32 to vector<1x256xf32>
    %17 = arith.divf %15, %16 : vector<1x256xf32>
    %18 = math.floor %17 : vector<1x256xf32>
    %cst_8 = arith.constant 6.28318548 : f32
    %19 = vector.broadcast %cst_8 : f32 to vector<1x256xf32>
    %20 = arith.mulf %19, %18 : vector<1x256xf32>
    %21 = arith.subf %13, %20 : vector<1x256xf32>
    %22 = math.absf %21 : vector<1x256xf32>
    %cst_9 = arith.constant 0.000000e+00 : f32
    %23 = vector.broadcast %cst_9 : f32 to vector<1x256xf32>
    %24 = arith.subf %23, %22 : vector<1x256xf32>
    %25 = arith.cmpf ogt, %24, %9 : vector<1x256xf32>
    %26 = vector.broadcast %11 : f32 to vector<1x256xf32>
    %27 = arith.select %25, %26, %10 : vector<1x256xi1>, vector<1x256xf32>
    %28 = arith.select %25, %24, %9 : vector<1x256xi1>, vector<1x256xf32>
    %c1 = arith.constant 1 : index
    %29 = memref.load %arg2[%c1] : memref<6xf32, #tpu.memory_space<smem>>
    %30 = vector.broadcast %29 : f32 to vector<1x256xf32>
    %31 = arith.subf %8, %30 : vector<1x256xf32>
    %cst_10 = arith.constant 3.14159274 : f32
    %32 = vector.broadcast %cst_10 : f32 to vector<1x256xf32>
    %33 = arith.addf %31, %32 : vector<1x256xf32>
    %cst_11 = arith.constant 6.28318548 : f32
    %34 = vector.broadcast %cst_11 : f32 to vector<1x256xf32>
    %35 = arith.divf %33, %34 : vector<1x256xf32>
    %36 = math.floor %35 : vector<1x256xf32>
    %cst_12 = arith.constant 6.28318548 : f32
    %37 = vector.broadcast %cst_12 : f32 to vector<1x256xf32>
    %38 = arith.mulf %37, %36 : vector<1x256xf32>
    %39 = arith.subf %31, %38 : vector<1x256xf32>
    %40 = math.absf %39 : vector<1x256xf32>
    %cst_13 = arith.constant 0.000000e+00 : f32
    %41 = vector.broadcast %cst_13 : f32 to vector<1x256xf32>
    %42 = arith.subf %41, %40 : vector<1x256xf32>
    %43 = arith.cmpf ogt, %42, %28 : vector<1x256xf32>
    %44 = vector.broadcast %29 : f32 to vector<1x256xf32>
    %45 = arith.select %43, %44, %27 : vector<1x256xi1>, vector<1x256xf32>
    %46 = arith.select %43, %42, %28 : vector<1x256xi1>, vector<1x256xf32>
    %c2 = arith.constant 2 : index
    %47 = memref.load %arg2[%c2] : memref<6xf32, #tpu.memory_space<smem>>
    %48 = vector.broadcast %47 : f32 to vector<1x256xf32>
    %49 = arith.subf %8, %48 : vector<1x256xf32>
    %cst_14 = arith.constant 3.14159274 : f32
    %50 = vector.broadcast %cst_14 : f32 to vector<1x256xf32>
    %51 = arith.addf %49, %50 : vector<1x256xf32>
    %cst_15 = arith.constant 6.28318548 : f32
    %52 = vector.broadcast %cst_15 : f32 to vector<1x256xf32>
    %53 = arith.divf %51, %52 : vector<1x256xf32>
    %54 = math.floor %53 : vector<1x256xf32>
    %cst_16 = arith.constant 6.28318548 : f32
    %55 = vector.broadcast %cst_16 : f32 to vector<1x256xf32>
    %56 = arith.mulf %55, %54 : vector<1x256xf32>
    %57 = arith.subf %49, %56 : vector<1x256xf32>
    %58 = math.absf %57 : vector<1x256xf32>
    %cst_17 = arith.constant 0.000000e+00 : f32
    %59 = vector.broadcast %cst_17 : f32 to vector<1x256xf32>
    %60 = arith.subf %59, %58 : vector<1x256xf32>
    %61 = arith.cmpf ogt, %60, %46 : vector<1x256xf32>
    %62 = vector.broadcast %47 : f32 to vector<1x256xf32>
    %63 = arith.select %61, %62, %45 : vector<1x256xi1>, vector<1x256xf32>
    %64 = arith.select %61, %60, %46 : vector<1x256xi1>, vector<1x256xf32>
    %c3 = arith.constant 3 : index
    %65 = memref.load %arg2[%c3] : memref<6xf32, #tpu.memory_space<smem>>
    %66 = vector.broadcast %65 : f32 to vector<1x256xf32>
    %67 = arith.subf %8, %66 : vector<1x256xf32>
    %cst_18 = arith.constant 3.14159274 : f32
    %68 = vector.broadcast %cst_18 : f32 to vector<1x256xf32>
    %69 = arith.addf %67, %68 : vector<1x256xf32>
    %cst_19 = arith.constant 6.28318548 : f32
    %70 = vector.broadcast %cst_19 : f32 to vector<1x256xf32>
    %71 = arith.divf %69, %70 : vector<1x256xf32>
    %72 = math.floor %71 : vector<1x256xf32>
    %cst_20 = arith.constant 6.28318548 : f32
    %73 = vector.broadcast %cst_20 : f32 to vector<1x256xf32>
    %74 = arith.mulf %73, %72 : vector<1x256xf32>
    %75 = arith.subf %67, %74 : vector<1x256xf32>
    %76 = math.absf %75 : vector<1x256xf32>
    %cst_21 = arith.constant 0.000000e+00 : f32
    %77 = vector.broadcast %cst_21 : f32 to vector<1x256xf32>
    %78 = arith.subf %77, %76 : vector<1x256xf32>
    %79 = arith.cmpf ogt, %78, %64 : vector<1x256xf32>
    %80 = vector.broadcast %65 : f32 to vector<1x256xf32>
    %81 = arith.select %79, %80, %63 : vector<1x256xi1>, vector<1x256xf32>
    %82 = arith.select %79, %78, %64 : vector<1x256xi1>, vector<1x256xf32>
    %c4 = arith.constant 4 : index
    %83 = memref.load %arg2[%c4] : memref<6xf32, #tpu.memory_space<smem>>
    %84 = vector.broadcast %83 : f32 to vector<1x256xf32>
    %85 = arith.subf %8, %84 : vector<1x256xf32>
    %cst_22 = arith.constant 3.14159274 : f32
    %86 = vector.broadcast %cst_22 : f32 to vector<1x256xf32>
    %87 = arith.addf %85, %86 : vector<1x256xf32>
    %cst_23 = arith.constant 6.28318548 : f32
    %88 = vector.broadcast %cst_23 : f32 to vector<1x256xf32>
    %89 = arith.divf %87, %88 : vector<1x256xf32>
    %90 = math.floor %89 : vector<1x256xf32>
    %cst_24 = arith.constant 6.28318548 : f32
    %91 = vector.broadcast %cst_24 : f32 to vector<1x256xf32>
    %92 = arith.mulf %91, %90 : vector<1x256xf32>
    %93 = arith.subf %85, %92 : vector<1x256xf32>
    %94 = math.absf %93 : vector<1x256xf32>
    %cst_25 = arith.constant 0.000000e+00 : f32
    %95 = vector.broadcast %cst_25 : f32 to vector<1x256xf32>
    %96 = arith.subf %95, %94 : vector<1x256xf32>
    %97 = arith.cmpf ogt, %96, %82 : vector<1x256xf32>
    %98 = vector.broadcast %83 : f32 to vector<1x256xf32>
    %99 = arith.select %97, %98, %81 : vector<1x256xi1>, vector<1x256xf32>
    %100 = arith.select %97, %96, %82 : vector<1x256xi1>, vector<1x256xf32>
    %c5 = arith.constant 5 : index
    %101 = memref.load %arg2[%c5] : memref<6xf32, #tpu.memory_space<smem>>
    %102 = vector.broadcast %101 : f32 to vector<1x256xf32>
    %103 = arith.subf %8, %102 : vector<1x256xf32>
    %cst_26 = arith.constant 3.14159274 : f32
    %104 = vector.broadcast %cst_26 : f32 to vector<1x256xf32>
    %105 = arith.addf %103, %104 : vector<1x256xf32>
    %cst_27 = arith.constant 6.28318548 : f32
    %106 = vector.broadcast %cst_27 : f32 to vector<1x256xf32>
    %107 = arith.divf %105, %106 : vector<1x256xf32>
    %108 = math.floor %107 : vector<1x256xf32>
    %cst_28 = arith.constant 6.28318548 : f32
    %109 = vector.broadcast %cst_28 : f32 to vector<1x256xf32>
    %110 = arith.mulf %109, %108 : vector<1x256xf32>
    %111 = arith.subf %103, %110 : vector<1x256xf32>
    %112 = math.absf %111 : vector<1x256xf32>
    %cst_29 = arith.constant 0.000000e+00 : f32
    %113 = vector.broadcast %cst_29 : f32 to vector<1x256xf32>
    %114 = arith.subf %113, %112 : vector<1x256xf32>
    %115 = arith.cmpf ogt, %114, %100 : vector<1x256xf32>
    %116 = vector.broadcast %101 : f32 to vector<1x256xf32>
    %117 = arith.select %115, %116, %99 : vector<1x256xi1>, vector<1x256xf32>
    %cst_30 = arith.constant 6.28318548 : f32
    %118 = vector.broadcast %cst_30 : f32 to vector<1x256xf32>
    %119 = arith.divf %117, %118 : vector<1x256xf32>
    %120 = math.floor %119 : vector<1x256xf32>
    %cst_31 = arith.constant 6.28318548 : f32
    %121 = vector.broadcast %cst_31 : f32 to vector<1x256xf32>
    %122 = arith.mulf %121, %120 : vector<1x256xf32>
    %123 = arith.subf %117, %122 : vector<1x256xf32>
    %c0_32 = arith.constant 0 : index
    %124 = memref.load %arg1[%c0_32] : memref<1xf32, #tpu.memory_space<smem>>
    %125 = vector.broadcast %124 : f32 to vector<1x256xf32>
    %126 = arith.mulf %123, %125 : vector<1x256xf32>
    %c0_33 = arith.constant 0 : index
    %c0_34 = arith.constant 0 : index
    %127 = vector.load %arg4[%c0_33, %c0_34] : memref<1x256xf32, #tpu.memory_space<vmem>>, vector<1x256xf32>
    %128 = arith.addf %126, %127 : vector<1x256xf32>
    %c0_35 = arith.constant 0 : index
    %c0_36 = arith.constant 0 : index
    %129 = vector.load %arg5[%c0_35, %c0_36] : memref<1x256xf32, #tpu.memory_space<vmem>>, vector<1x256xf32>
    tpu.vector_store %arg5[%c0_35, %c0_36], %128 {strides = array<i32>} : memref<1x256xf32, #tpu.memory_space<vmem>>, vector<1x256xf32>,
    return
  }
  func.func @transform_0(%arg0: i32) -> i32 {
    %c0_i32 = arith.constant 0 : i32
    %c0_i32_0 = arith.constant 0 : i32
    return %c0_i32 : i32
  }
  func.func @transform_1(%arg0: i32) -> i32 {
    %c0_i32 = arith.constant 0 : i32
    %c0_i32_0 = arith.constant 0 : i32
    return %c0_i32 : i32
  }
  func.func @transform_2(%arg0: i32) -> (i32, i32) {
    %c0_i32 = arith.constant 0 : i32
    %c0_i32_0 = arith.constant 0 : i32
    return %arg0, %c0_i32 : i32, i32
  }
  func.func @transform_3(%arg0: i32) -> (i32, i32) {
    %c0_i32 = arith.constant 0 : i32
    %c0_i32_0 = arith.constant 0 : i32
    return %arg0, %c0_i32 : i32, i32
  }
  func.func @transform_4(%arg0: i32) -> (i32, i32) {
    %c0_i32 = arith.constant 0 : i32
    %c0_i32_0 = arith.constant 0 : i32
    return %arg0, %c0_i32 : i32, i32
  }
}

module attributes {stable_mosaic.version = 11 : i64} {
  func.func @_modulate_kernel(%arg0: i32, %arg1: i32, %arg2: i32, %arg3: memref<3xf32, #tpu.memory_space<smem>>, %arg4: memref<3xf32, #tpu.memory_space<smem>>, %arg5: memref<1x256xf32, #tpu.memory_space<vmem>>, %arg6: memref<1x256xf32, #tpu.memory_space<vmem>>, %arg7: memref<1x1x1x256xf32, #tpu.memory_space<vmem>>, %arg8: memref<1x1x1x256xf32, #tpu.memory_space<vmem>>, %arg9: memref<1x1x1x256xf32, #tpu.memory_space<vmem>>, %arg10: memref<1x1x1x256xf32, #tpu.memory_space<vmem>>, %arg11: memref<1x256xf32, #tpu.memory_space<vmem>>, %arg12: memref<1x256xf32, #tpu.memory_space<vmem>>) attributes {dimension_semantics = [#tpu.dimension_semantics<parallel>, #tpu.dimension_semantics<parallel>, #tpu.dimension_semantics<arbitrary>], iteration_bounds = array<i64: 3, 1, 2>, scalar_prefetch = 0 : i64, scratch_operands = 2 : i64, tpu.core_type = #tpu.core_type<tc>, window_params = [{transform_indices = @transform_0, window_bounds = array<i64: 3>}, {transform_indices = @transform_1, window_bounds = array<i64: 3>}, {transform_indices = @transform_2, window_bounds = array<i64: 1, 256>}, {transform_indices = @transform_3, window_bounds = array<i64: 1, 256>}, {transform_indices = @transform_4, window_bounds = array<i64: 1, 1, 1, 256>}, {transform_indices = @transform_5, window_bounds = array<i64: 1, 1, 1, 256>}, {transform_indices = @transform_6, window_bounds = array<i64: 1, 1, 1, 256>}, {transform_indices = @transform_7, window_bounds = array<i64: 1, 1, 1, 256>}]} {
    %0 = arith.index_cast %arg0 : i32 to index
    %1 = memref.load %arg3[%0] : memref<3xf32, #tpu.memory_space<smem>>
    %c0_i32 = arith.constant 0 : i32
    %2 = arith.cmpi eq, %arg2, %c0_i32 : i32
    %3 = arith.extui %2 : i1 to i32
    %c0_i32_0 = arith.constant 0 : i32
    %4 = arith.cmpi ne, %3, %c0_i32_0 : i32
    scf.if %4 {
      %cst = arith.constant 6.28318548 : f32
      %23 = arith.divf %cst, %1 : f32
      %c0_20 = arith.constant 0 : index
      %24 = memref.load %arg4[%c0_20] : memref<3xf32, #tpu.memory_space<smem>>
      %c1 = arith.constant 1 : index
      %25 = memref.load %arg4[%c1] : memref<3xf32, #tpu.memory_space<smem>>
      %c2 = arith.constant 2 : index
      %26 = memref.load %arg4[%c2] : memref<3xf32, #tpu.memory_space<smem>>
      %c0_21 = arith.constant 0 : index
      %c0_22 = arith.constant 0 : index
      %27 = vector.load %arg5[%c0_21, %c0_22] : memref<1x256xf32, #tpu.memory_space<vmem>>, vector<1x256xf32>
      %28 = vector.broadcast %26 : f32 to vector<1x256xf32>
      %29 = arith.addf %27, %28 : vector<1x256xf32>
      %cst_23 = arith.constant -5.000000e-01 : f32
      %30 = arith.mulf %cst_23, %23 : f32
      %31 = vector.broadcast %30 : f32 to vector<1x256xf32>
      %32 = arith.mulf %31, %29 : vector<1x256xf32>
      %33 = vector.broadcast %25 : f32 to vector<1x256xf32>
      %34 = arith.mulf %32, %33 : vector<1x256xf32>
      %35 = vector.broadcast %24 : f32 to vector<1x256xf32>
      %36 = arith.mulf %34, %35 : vector<1x256xf32>
      %37 = math.exp %36 : vector<1x256xf32>
      %38 = vector.broadcast %23 : f32 to vector<1x256xf32>
      %39 = arith.mulf %38, %29 : vector<1x256xf32>
      %cst_24 = arith.constant 1.000000e+00 : f32
      %40 = arith.subf %24, %cst_24 : f32
      %41 = vector.broadcast %40 : f32 to vector<1x256xf32>
      %42 = arith.mulf %39, %41 : vector<1x256xf32>
      %c0_25 = arith.constant 0 : index
      %c0_26 = arith.constant 0 : index
      %43 = vector.load %arg6[%c0_25, %c0_26] : memref<1x256xf32, #tpu.memory_space<vmem>>, vector<1x256xf32>
      %44 = arith.mulf %43, %37 : vector<1x256xf32>
      %45 = math.cos %42 : vector<1x256xf32>
      %46 = arith.mulf %44, %45 : vector<1x256xf32>
      %c0_27 = arith.constant 0 : index
      %c0_28 = arith.constant 0 : index
      %47 = vector.load %arg11[%c0_27, %c0_28] : memref<1x256xf32, #tpu.memory_space<vmem>>, vector<1x256xf32>
      tpu.vector_store %arg11[%c0_27, %c0_28], %46 {strides = array<i32>} : memref<1x256xf32, #tpu.memory_space<vmem>>, vector<1x256xf32>,
      %cst_29 = arith.constant 0.000000e+00 : f32
      %48 = vector.broadcast %cst_29 : f32 to vector<1x256xf32>
      %49 = arith.subf %48, %44 : vector<1x256xf32>
      %50 = math.sin %42 : vector<1x256xf32>
      %51 = arith.mulf %49, %50 : vector<1x256xf32>
      %c0_30 = arith.constant 0 : index
      %c0_31 = arith.constant 0 : index
      %52 = vector.load %arg12[%c0_30, %c0_31] : memref<1x256xf32, #tpu.memory_space<vmem>>, vector<1x256xf32>
      tpu.vector_store %arg12[%c0_30, %c0_31], %51 {strides = array<i32>} : memref<1x256xf32, #tpu.memory_space<vmem>>, vector<1x256xf32>,
    } else {
    }
    %c0 = arith.constant 0 : index
    %c0_1 = arith.constant 0 : index
    %5 = vector.load %arg11[%c0, %c0_1] : memref<1x256xf32, #tpu.memory_space<vmem>>, vector<1x256xf32>
    %c0_2 = arith.constant 0 : index
    %c0_3 = arith.constant 0 : index
    %6 = vector.load %arg12[%c0_2, %c0_3] : memref<1x256xf32, #tpu.memory_space<vmem>>, vector<1x256xf32>
    %c0_4 = arith.constant 0 : index
    %c0_5 = arith.constant 0 : index
    %c0_6 = arith.constant 0 : index
    %c0_7 = arith.constant 0 : index
    %7 = vector.load %arg7[%c0_4, %c0_5, %c0_6, %c0_7] : memref<1x1x1x256xf32, #tpu.memory_space<vmem>>, vector<1x1x1x256xf32>
    %8 = vector.shape_cast %7 : vector<1x1x1x256xf32> to vector<1x256xf32>
    %c0_8 = arith.constant 0 : index
    %c0_9 = arith.constant 0 : index
    %c0_10 = arith.constant 0 : index
    %c0_11 = arith.constant 0 : index
    %9 = vector.load %arg8[%c0_8, %c0_9, %c0_10, %c0_11] : memref<1x1x1x256xf32, #tpu.memory_space<vmem>>, vector<1x1x1x256xf32>
    %10 = vector.shape_cast %9 : vector<1x1x1x256xf32> to vector<1x256xf32>
    %11 = arith.mulf %8, %5 : vector<1x256xf32>
    %12 = arith.mulf %10, %6 : vector<1x256xf32>
    %13 = arith.subf %11, %12 : vector<1x256xf32>
    %c0_12 = arith.constant 0 : index
    %c0_13 = arith.constant 0 : index
    %c0_14 = arith.constant 0 : index
    %c0_15 = arith.constant 0 : index
    %14 = vector.load %arg9[%c0_12, %c0_13, %c0_14, %c0_15] : memref<1x1x1x256xf32, #tpu.memory_space<vmem>>, vector<1x1x1x256xf32>
    %15 = vector.shape_cast %14 : vector<1x1x1x256xf32> to vector<1x256xf32>
    %16 = vector.shape_cast %13 : vector<1x256xf32> to vector<1x1x1x256xf32>
    tpu.vector_store %arg9[%c0_12, %c0_13, %c0_14, %c0_15], %16 {strides = array<i32>} : memref<1x1x1x256xf32, #tpu.memory_space<vmem>>, vector<1x1x1x256xf32>,
    %17 = arith.mulf %8, %6 : vector<1x256xf32>
    %18 = arith.mulf %10, %5 : vector<1x256xf32>
    %19 = arith.addf %17, %18 : vector<1x256xf32>
    %c0_16 = arith.constant 0 : index
    %c0_17 = arith.constant 0 : index
    %c0_18 = arith.constant 0 : index
    %c0_19 = arith.constant 0 : index
    %20 = vector.load %arg10[%c0_16, %c0_17, %c0_18, %c0_19] : memref<1x1x1x256xf32, #tpu.memory_space<vmem>>, vector<1x1x1x256xf32>
    %21 = vector.shape_cast %20 : vector<1x1x1x256xf32> to vector<1x256xf32>
    %22 = vector.shape_cast %19 : vector<1x256xf32> to vector<1x1x1x256xf32>
    tpu.vector_store %arg10[%c0_16, %c0_17, %c0_18, %c0_19], %22 {strides = array<i32>} : memref<1x1x1x256xf32, #tpu.memory_space<vmem>>, vector<1x1x1x256xf32>,
    return
  }
  func.func @transform_0(%arg0: i32, %arg1: i32, %arg2: i32) -> i32 {
    %c0_i32 = arith.constant 0 : i32
    %c0_i32_0 = arith.constant 0 : i32
    return %c0_i32 : i32
  }
  func.func @transform_1(%arg0: i32, %arg1: i32, %arg2: i32) -> i32 {
    %c0_i32 = arith.constant 0 : i32
    %c0_i32_0 = arith.constant 0 : i32
    return %c0_i32 : i32
  }
  func.func @transform_2(%arg0: i32, %arg1: i32, %arg2: i32) -> (i32, i32) {
    %c0_i32 = arith.constant 0 : i32
    %c0_i32_0 = arith.constant 0 : i32
    return %arg1, %c0_i32 : i32, i32
  }
  func.func @transform_3(%arg0: i32, %arg1: i32, %arg2: i32) -> (i32, i32) {
    %c0_i32 = arith.constant 0 : i32
    %c0_i32_0 = arith.constant 0 : i32
    return %arg1, %c0_i32 : i32, i32
  }
  func.func @transform_4(%arg0: i32, %arg1: i32, %arg2: i32) -> (i32, i32, i32, i32) {
    %c0_i32 = arith.constant 0 : i32
    %c0_i32_0 = arith.constant 0 : i32
    return %arg2, %arg0, %arg1, %c0_i32 : i32, i32, i32, i32
  }
  func.func @transform_5(%arg0: i32, %arg1: i32, %arg2: i32) -> (i32, i32, i32, i32) {
    %c0_i32 = arith.constant 0 : i32
    %c0_i32_0 = arith.constant 0 : i32
    return %arg2, %arg0, %arg1, %c0_i32 : i32, i32, i32, i32
  }
  func.func @transform_6(%arg0: i32, %arg1: i32, %arg2: i32) -> (i32, i32, i32, i32) {
    %c0_i32 = arith.constant 0 : i32
    %c0_i32_0 = arith.constant 0 : i32
    return %arg2, %arg0, %arg1, %c0_i32 : i32, i32, i32, i32
  }
  func.func @transform_7(%arg0: i32, %arg1: i32, %arg2: i32) -> (i32, i32, i32, i32) {
    %c0_i32 = arith.constant 0 : i32
    %c0_i32_0 = arith.constant 0 : i32
    return %arg2, %arg0, %arg1, %c0_i32 : i32, i32, i32, i32
  }
}

</mosaic_0001>

<llo_original>
// kernel: custom-call
$region0: #{custom-call}
  %s0 = inlined_call_operand.hbm [shape: c64[2,3,16,16], index: 0, kind: input, shape index: {}]
  %s1 = inlined_call_operand.vmem [shape: f32[2,3,16,16], index: 1, kind: output, shape index: {}]
  $region1: #{custom-call} parent=0
    #allocation0 [shape = 's32[1]{0}', space=sflag, size = 0x4, scoped, tag = 'scoped memory for custom-call']
    %2 = vsyncpa [#allocation0], 0
    %s3 = sshll.u32 %s1, 4
    %s4 = int_to_ptr.vmem [resolvable:$true] %s3
    %6 = dma.hbm_to_vmem [thread:$0]  %s0, 1536, %s4, [#allocation0]
    %7 = dma.done [#allocation0], 1536
    %8 = vsyncpa [#allocation0], 1

// kernel: custom-call.1
$region0: #{custom-call.1}
  %s0 = inlined_call_operand.hbm [shape: c64[2,3,16,16], index: 0, kind: input, shape index: {}]
  %s1 = inlined_call_operand.vmem [shape: f32[2,3,16,16], index: 1, kind: output, shape index: {}]
  %s2 = scalar_lea.hbm %s0, 1536
  $region1: #{custom-call.1} parent=0
    #allocation0 [shape = 's32[1]{0}', space=sflag, size = 0x4, scoped, tag = 'scoped memory for custom-call.1']
    %3 = vsyncpa [#allocation0], 0
    %s4 = sshll.u32 %s1, 4
    %s5 = int_to_ptr.vmem [resolvable:$true] %s4
    %7 = dma.hbm_to_vmem [thread:$0]  %s2, 1536, %s5, [#allocation0]
    %8 = dma.done [#allocation0], 1536
    %9 = vsyncpa [#allocation0], 1

// kernel: custom-call.2
$region0: #{custom-call.2}
  %s0 = inlined_call_operand.vmem [shape: f32[2,3,16,16], index: 0, kind: input, shape index: {}]
  %s1 = inlined_call_operand.vmem [shape: f32[2,3,16,16], index: 1, kind: input, shape index: {}]
  %s2 = inlined_call_operand.hbm [shape: c64[2,3,16,16], index: 2, kind: output, shape index: {}]
  %s3 = scalar_lea.hbm %s2, 1536
  $region1: #{custom-call.2} parent=0
    #allocation0 [shape = 's32[1]{0}', space=sflag, size = 0x4, scoped, tag = 'scoped memory for custom-call.2']
    %4 = vsyncpa [#allocation0], 0
    %s5 = sshll.u32 %s0, 4
    %s6 = int_to_ptr.vmem [resolvable:$true] %s5
    %8 = dma.vmem_to_hbm [thread:$0]  %s6, 1536, %s2, [#allocation0]
    %9 = dma.done [#allocation0], 1536
    %10 = vsyncpa [#allocation0], 1
  $region2: #{custom-call.2} parent=0
    #allocation1 [shape = 's32[1]{0}', space=sflag, size = 0x4, scoped, tag = 'scoped memory for custom-call.2']
    %11 = vsyncpa [#allocation1], 0
    %s12 = sshll.u32 %s1, 4
    %s13 = int_to_ptr.vmem [resolvable:$true] %s12
    %15 = dma.vmem_to_hbm [thread:$0]  %s13, 1536, %s3, [#allocation1]
    %16 = dma.done [#allocation1], 1536
    %17 = vsyncpa [#allocation1], 1

// kernel: _hologram_forward.2
$region0: #{_hologram_forward.2}
  #allocation0 [shape = 'u32[]', space=smem, size = 0x4, offset = 0x4, fixed_abs, tag = 'smem constant byte address 0x4 - core index']
  #allocation1 [shape = 'u32[144,128]{1,0:T(1,128)}', space=vmem, size = 0x12000, scoped, tag = 'internal scratch']
  #allocation2 [shape = 'f32[1]{0:T(128)S(6)}', space=smem, size = 0x200, scoped, tag = 'scoped memory for _hologram_forward.2']
  %s0 = inlined_call_operand.<no memory space> [shape: f32[1], index: 0, kind: input, shape index: {}]
  %s1 = inlined_call_operand.vmem [shape: f32[6], index: 1, kind: input, shape index: {}]
  %s2 = inlined_call_operand.vmem [shape: f32[1,256], index: 2, kind: input, shape index: {}]
  %s3 = inlined_call_operand.vmem [shape: f32[1,256], index: 3, kind: input, shape index: {}]
  %s4 = inlined_call_operand.vmem [shape: f32[1,256], index: 4, kind: output, shape index: {}]
  %s5 = sld [smem:[#allocation0]]
  $region30: #{_hologram_forward.2} parent=0
    _
  %s7 = ssub.s32 1, %s5
  %s8 = scalar_select 0, %s7, %s5
  %9 = sst [smem:[#allocation2]] %s0
  $region1: #{_hologram_forward.2} parent=0
    #allocation3 [shape = 'u8[512]{0}', space=smem, size = 0x200, scoped, tag = 'input window, operand 1, single buffered']
    #allocation4 [shape = 's32[1]{0}', space=sflag, size = 0x4, scoped, tag = 'scoped memory for _hologram_forward.2']
    %10 = vsyncpa [#allocation4], 0
    // Predicated region
    $region2: #{_hologram_forward.2} parent=1 // pred_check
      _
    $region3: #{_hologram_forward.2} parent=1 // pred_check_branch
      %12 = sbr.rel (0) target = $region5
    $region4: #{_hologram_forward.2} parent=1 // pred_region
      _
    $region5: #{_hologram_forward.2} parent=1 // pred_fallthru
      _
    // Predicated region
    $region6: #{_hologram_forward.2} parent=1 // pred_check
      _
    $region7: #{_hologram_forward.2} parent=1 // pred_check_branch
      %14 = sbr.rel (0) target = $region9
    $region8: #{_hologram_forward.2} parent=1 // pred_region
      %s16 = ssub.s32 16, 16
      %17 = vsyncadd [#allocation4], %s16
      %s19 = sshll.u32 %s1, 4
      %s20 = int_to_ptr.vmem [resolvable:$true] %s19
      %22 = dma.vmem_to_smem %s20, 16, [#allocation3], [#allocation4]
    $region9: #{_hologram_forward.2} parent=1 // pred_fallthru
      _
    // Predicated region
    $region10: #{_hologram_forward.2} parent=1 // pred_check
      _
    $region11: #{_hologram_forward.2} parent=1 // pred_check_branch
      %24 = sbr.rel (0) target = $region13
    $region12: #{_hologram_forward.2} parent=1 // pred_region
      _
    $region13: #{_hologram_forward.2} parent=1 // pred_fallthru
      _
    // Predicated region
    $region14: #{_hologram_forward.2} parent=1 // pred_check
      _
    $region15: #{_hologram_forward.2} parent=1 // pred_check_branch
      %26 = sbr.rel (0) target = $region17
    $region16: #{_hologram_forward.2} parent=1 // pred_region
      _
    $region17: #{_hologram_forward.2} parent=1 // pred_fallthru
      _
    // Predicated region
    $region18: #{_hologram_forward.2} parent=1 // pred_check
      _
    $region19: #{_hologram_forward.2} parent=1 // pred_check_branch
      %28 = sbr.rel (0) target = $region21
    $region20: #{_hologram_forward.2} parent=1 // pred_region
      %29 = dma.done [#allocation4], 16
    $region21: #{_hologram_forward.2} parent=1 // pred_fallthru
      _
    %30 = sfence
    %v31 = vld [vmem:[%s2] sm:$0x3]
    %v32 = vadd.f32 %v31, 3.1415927
    %v33 = vrcp.pop 6.2831855
    %v34 = vmul.f32 %v32, %v33
    %v35 = vfloor.f32 %v34
    %v36 = vmul.f32 %v35, 6.2831855
    %v37 = vsub.f32 %v31, %v36
    %s38 = sld [smem:[#allocation3]]
    %v39 = vstv %s38
    %v40 = vsub.f32 %v37, %v39
    %v41 = vadd.f32 %v40, 3.1415927
    %v42 = vmul.f32 %v41, %v33
    %v43 = vfloor.f32 %v42
    %v44 = vmul.f32 %v43, 6.2831855
    %v45 = vsub.f32 %v40, %v44
    %v46 = vand.u32 2147483647, %v45
    %v47 = vsub.f32 0.0, %v46
    %vm48 = vcmp.gt.f32.partialorder %v47, -inf
    %v49 = vsel %vm48, %v39, 0.0
    %v50 = vsel %vm48, %v47, -inf
    %s51 = sld [smem:[#allocation3 + $0x1]]
    %v52 = vstv %s51
    %v53 = vsub.f32 %v37, %v52
    %v54 = vadd.f32 %v53, 3.1415927
    %v55 = vmul.f32 %v54, %v33
    %v56 = vfloor.f32 %v55
    %v57 = vmul.f32 %v56, 6.2831855
    %v58 = vsub.f32 %v53, %v57
    %v59 = vand.u32 2147483647, %v58
    %v60 = vsub.f32 0.0, %v59
    %vm61 = vcmp.gt.f32.partialorder %v60, %v50
    %v62 = vsel %vm61, %v52, %v49
    %v63 = vsel %vm61, %v60, %v50
    %s64 = sld [smem:[#allocation3 + $0x2]]
    %v65 = vstv %s64
    %v66 = vsub.f32 %v37, %v65
    %v67 = vadd.f32 %v66, 3.1415927
    %v68 = vmul.f32 %v67, %v33
    %v69 = vfloor.f32 %v68
    %v70 = vmul.f32 %v69, 6.2831855
    %v71 = vsub.f32 %v66, %v70
    %v72 = vand.u32 2147483647, %v71
    %v73 = vsub.f32 0.0, %v72
    %vm74 = vcmp.gt.f32.partialorder %v73, %v63
    %v75 = vsel %vm74, %v65, %v62
    %v76 = vsel %vm74, %v73, %v63
    %s77 = sld [smem:[#allocation3 + $0x3]]
    %v78 = vstv %s77
    %v79 = vsub.f32 %v37, %v78
    %v80 = vadd.f32 %v79, 3.1415927
    %v81 = vmul.f32 %v80, %v33
    %v82 = vfloor.f32 %v81
    %v83 = vmul.f32 %v82, 6.2831855
    %v84 = vsub.f32 %v79, %v83
    %v85 = vand.u32 2147483647, %v84
    %v86 = vsub.f32 0.0, %v85
    %vm87 = vcmp.gt.f32.partialorder %v86, %v76
    %v88 = vsel %vm87, %v78, %v75
    %v89 = vsel %vm87, %v86, %v76
    %s90 = sld [smem:[#allocation3 + $0x4]]
    %v91 = vstv %s90
    %v92 = vsub.f32 %v37, %v91
    %v93 = vadd.f32 %v92, 3.1415927
    %v94 = vmul.f32 %v93, %v33
    %v95 = vfloor.f32 %v94
    %v96 = vmul.f32 %v95, 6.2831855
    %v97 = vsub.f32 %v92, %v96
    %v98 = vand.u32 2147483647, %v97
    %v99 = vsub.f32 0.0, %v98
    %vm100 = vcmp.gt.f32.partialorder %v99, %v89
    %v101 = vsel %vm100, %v91, %v88
    %v102 = vsel %vm100, %v99, %v89
    %s103 = sld [smem:[#allocation3 + $0x5]]
    %v104 = vstv %s103
    %v105 = vsub.f32 %v37, %v104
    %v106 = vadd.f32 %v105, 3.1415927
    %v107 = vmul.f32 %v106, %v33
    %v108 = vfloor.f32 %v107
    %v109 = vmul.f32 %v108, 6.2831855
    %v110 = vsub.f32 %v105, %v109
    %v111 = vand.u32 2147483647, %v110
    %v112 = vsub.f32 0.0, %v111
    %vm113 = vcmp.gt.f32.partialorder %v112, %v102
    %v114 = vsel %vm113, %v104, %v101
    %v115 = vmul.f32 %v114, %v33
    %v116 = vfloor.f32 %v115
    %v117 = vmul.f32 %v116, 6.2831855
    %v118 = vsub.f32 %v114, %v117
    %s119 = sld [smem:[#allocation2]]
    %v120 = vstv %s119
    %v121 = vmul.f32 %v118, %v120
    %v122 = vld [vmem:[%s3] sm:$0x3]
    %v123 = vadd.f32 %v121, %v122
    %v124 = vlaneseq
    %vm125 = vcmp.ge.s32.totalorder %v124, 0
    %vm126 = vcmp.lt.s32.totalorder %v124, 256
    %vm127 = vmand %vm125, %vm126
    %128 = vst.msk [vmem:[%s4] sm:$0x3] %vm127, %v123
    // Predicated region
    $region22: #{_hologram_forward.2} parent=1 // pred_check
      _
    $region23: #{_hologram_forward.2} parent=1 // pred_check_branch
      %130 = sbr.rel (0) target = $region25
    $region24: #{_hologram_forward.2} parent=1 // pred_region
      _
    $region25: #{_hologram_forward.2} parent=1 // pred_fallthru
      _
    // Predicated region
    $region26: #{_hologram_forward.2} parent=1 // pred_check
      _
    $region27: #{_hologram_forward.2} parent=1 // pred_check_branch
      %132 = sbr.rel (0) target = $region29
    $region28: #{_hologram_forward.2} parent=1 // pred_region
      _
    $region29: #{_hologram_forward.2} parent=1 // pred_fallthru
      _
    %133 = vsyncpa [#allocation4], 1

// kernel: _hologram_forward.3
$region0: #{_hologram_forward.3}
  #allocation0 [shape = 'u32[]', space=smem, size = 0x4, offset = 0x4, fixed_abs, tag = 'smem constant byte address 0x4 - core index']
  #allocation1 [shape = 'u32[144,128]{1,0:T(1,128)}', space=vmem, size = 0x12000, scoped, tag = 'internal scratch']
  #allocation2 [shape = 'f32[1,256]{1,0:T(1,128)}', space=vmem, size = 0x400, scoped, tag = 'scratch operand']
  #allocation3 [shape = 'f32[1,256]{1,0:T(1,128)}', space=vmem, size = 0x400, scoped, tag = 'scratch operand']
  %s0 = inlined_call_operand.vmem [shape: f32[3], index: 0, kind: input, shape index: {}]
  %s1 = inlined_call_operand.vmem [shape: f32[3], index: 1, kind: input, shape index: {}]
  %s2 = inlined_call_operand.vmem [shape: f32[1,256], index: 2, kind: input, shape index: {}]
  %s3 = inlined_call_operand.vmem [shape: f32[1,256], index: 3, kind: input, shape index: {}]
  %s4 = inlined_call_operand.vmem [shape: f32[2,3,1,256], index: 4, kind: input, shape index: {}]
  %s5 = inlined_call_operand.vmem [shape: f32[2,3,1,256], index: 5, kind: input, shape index: {}]
  %s6 = inlined_call_operand.vmem [shape: f32[2,3,1,256], index: 6, kind: output, shape index: {0}]
  %s7 = inlined_call_operand.vmem [shape: f32[2,3,1,256], index: 7, kind: output, shape index: {1}]
  %8 = xla_tuple %s6, %s7
  %s9 = sld [smem:[#allocation0]]
  $region77: #{_hologram_forward.3} parent=0
    _
  %s11 = ssub.s32 1, %s9
  %s12 = scalar_select 0, %s11, %s9
  $region1: #{_hologram_forward.3} parent=0
    #allocation4 [shape = 'u8[512]{0}', space=smem, size = 0x200, scoped, tag = 'input window, operand 0, single buffered']
    #allocation5 [shape = 's32[2]{0}', space=sflag, size = 0x8, scoped, tag = 'scoped memory for _hologram_forward.3']
    #allocation6 [shape = 'u8[512]{0}', space=smem, size = 0x200, scoped, tag = 'input window, operand 1, single buffered']
    #allocation7 [shape = 's32[1]{0}', space=sflag, size = 0x4, scoped, tag = 'scoped memory for _hologram_forward.3']
    %13 = vsyncpa [#allocation5], 0
    %14 = vsyncpa [#allocation7], 0
    loop: start=0, step=1, limit=8
    $region2: #{_hologram_forward.3} parent=1 // loop_pre_header
      _
    $region3: #{_hologram_forward.3} parent=1 // loop_header
      %s16 = sphi 0, %s20
      %p17 = scmp.ge.s32.totalorder %s16, 8
      %s23 = sphi 0, %s42
      %s24 = sphi 0, %s38
      %s25 = sphi 0, %s34
      %s26 = sphi 0, %s23
      %s27 = sphi 0, %s24
      %s28 = sphi 0, %s25
      %s29 = sphi 0, %s26
      %s30 = sphi 0, %s27
      %s31 = sphi 0, %s28
      %s43 = sphi 0, %s43
      %s45 = sphi 0, %s43
      %s46 = sphi 0, %s45
      %s60 = sphi 0, %s46
      %s64 = sphi 0, %s64
      %s66 = sphi 0, %s64
      %s67 = sphi 0, %s66
      %s81 = sphi 0, %s67
      %s87 = sphi 0, %s89
      %s90 = sphi 0, %s87
      %s91 = sphi 0, %s90
      %s107 = sphi 0, %s91
      %s113 = sphi 0, %s115
      %s116 = sphi 0, %s113
      %s117 = sphi 0, %s116
      %s133 = sphi 0, %s117
      %s143 = sphi 0, %s145
      %s146 = sphi 0, %s143
      %s147 = sphi 0, %s146
      %s163 = sphi 0, %s147
      %s173 = sphi 0, %s175
      %s176 = sphi 0, %s173
      %s177 = sphi 0, %s176
      %s193 = sphi 0, %s177
      %s203 = sphi 0, %s205
      %s206 = sphi 0, %s203
      %s207 = sphi 0, %s206
      %s223 = sphi 0, %s207
      %s233 = sphi 0, %s235
      %s236 = sphi 0, %s233
      %s237 = sphi 0, %s236
      %s253 = sphi 0, %s237
    $region4: #{_hologram_forward.3} parent=1 // loop_header_branch
      %19 = sbr.rel (%p17) target = $region8
    $region5: #{_hologram_forward.3} parent=1 // loop_body
      %s21 = ssub.s32 %s16, 1
      %s22 = ssub.s32 %s16, 2
      %s32 = sadd.s32 1, %s25
      %p33 = scmp.ge.s32.totalorder %s32, 2
      %s34 = scalar_select %p33, 0, %s32
      %s35 = sadd.s32 1, %s24
      %s36 = scalar_select %p33, %s35, %s24
      %p37 = scmp.ge.s32.totalorder %s36, 1
      %s38 = scalar_select %p37, 0, %s36
      %s39 = sadd.s32 1, %s23
      %s40 = scalar_select %p37, %s39, %s23
      %p41 = scmp.ge.s32.totalorder %s40, 3
      %s42 = scalar_select %p41, 0, %s40
      %s44 = sadd.s32 %s43, 1
      %p47 = scmp.eq.s32.totalorder %s16, 5
      %p48 = scmp.ne.s32.totalorder %s43, %s45
      %p49 = scmp.eq.s32.totalorder %s16, 0
      %p50 = por %p48, %p49
      %p51 = scmp.ne.s32.totalorder %s43, %s45
      %p52 = scmp.eq.s32.totalorder %s21, 5
      %p53 = por %p51, %p52
      %p54 = scmp.ne.s32.totalorder %s45, %s46
      %p55 = scmp.eq.s32.totalorder %s21, 0
      %p56 = por %p54, %p55
      %p57 = scmp.ne.s32.totalorder %s45, %s46
      %p58 = scmp.eq.s32.totalorder %s22, 5
      %p59 = por %p57, %p58
      %p61 = scmp.ne.s32.totalorder %s46, %s60
      %p62 = scmp.eq.s32.totalorder %s22, 0
      %p63 = por %p61, %p62
      %s65 = sadd.s32 %s64, 1
      %p68 = scmp.eq.s32.totalorder %s16, 5
      %p69 = scmp.ne.s32.totalorder %s64, %s66
      %p70 = scmp.eq.s32.totalorder %s16, 0
      %p71 = por %p69, %p70
      %p72 = scmp.ne.s32.totalorder %s64, %s66
      %p73 = scmp.eq.s32.totalorder %s21, 5
      %p74 = por %p72, %p73
      %p75 = scmp.ne.s32.totalorder %s66, %s67
      %p76 = scmp.eq.s32.totalorder %s21, 0
      %p77 = por %p75, %p76
      %p78 = scmp.ne.s32.totalorder %s66, %s67
      %p79 = scmp.eq.s32.totalorder %s22, 5
      %p80 = por %p78, %p79
      %p82 = scmp.ne.s32.totalorder %s67, %s81
      %p83 = scmp.eq.s32.totalorder %s22, 0
      %p84 = por %p82, %p83
      %s85 = ssub.s32 %s24, %s38
      %p86 = scmp.eq.s32.totalorder %s85, 0
      %s88 = sadd.s32 %s87, 1
      %s89 = scalar_select %p86, %s87, %s88
      %p92 = pneg %p86
      %p93 = scmp.eq.s32.totalorder %s16, 5
      %p94 = por %p92, %p93
      %p95 = scmp.ne.s32.totalorder %s87, %s90
      %p96 = scmp.eq.s32.totalorder %s16, 0
      %p97 = por %p95, %p96
      %p98 = scmp.ne.s32.totalorder %s87, %s90
      %p99 = scmp.eq.s32.totalorder %s21, 5
      %p100 = por %p98, %p99
      %p101 = scmp.ne.s32.totalorder %s90, %s91
      %p102 = scmp.eq.s32.totalorder %s21, 0
      %p103 = por %p101, %p102
      %p104 = scmp.ne.s32.totalorder %s90, %s91
      %p105 = scmp.eq.s32.totalorder %s22, 5
      %p106 = por %p104, %p105
      %p108 = scmp.ne.s32.totalorder %s91, %s107
      %p109 = scmp.eq.s32.totalorder %s22, 0
      %p110 = por %p108, %p109
      %s111 = ssub.s32 %s24, %s38
      %p112 = scmp.eq.s32.totalorder %s111, 0
      %s114 = sadd.s32 %s113, 1
      %s115 = scalar_select %p112, %s113, %s114
      %p118 = pneg %p112
      %p119 = scmp.eq.s32.totalorder %s16, 5
      %p120 = por %p118, %p119
      %p121 = scmp.ne.s32.totalorder %s113, %s116
      %p122 = scmp.eq.s32.totalorder %s16, 0
      %p123 = por %p121, %p122
      %p124 = scmp.ne.s32.totalorder %s113, %s116
      %p125 = scmp.eq.s32.totalorder %s21, 5
      %p126 = por %p124, %p125
      %p127 = scmp.ne.s32.totalorder %s116, %s117
      %p128 = scmp.eq.s32.totalorder %s21, 0
      %p129 = por %p127, %p128
      %p130 = scmp.ne.s32.totalorder %s116, %s117
      %p131 = scmp.eq.s32.totalorder %s22, 5
      %p132 = por %p130, %p131
      %p134 = scmp.ne.s32.totalorder %s117, %s133
      %p135 = scmp.eq.s32.totalorder %s22, 0
      %p136 = por %p134, %p135
      %s137 = ssub.s32 %s25, %s34
      %s138 = ssub.s32 %s23, %s42
      %s139 = sor.u32 %s137, %s138
      %s140 = ssub.s32 %s24, %s38
      %s141 = sor.u32 %s139, %s140
      %p142 = scmp.eq.s32.totalorder %s141, 0
      %s144 = sadd.s32 %s143, 1
      %s145 = scalar_select %p142, %s143, %s144
      %p148 = pneg %p142
      %p149 = scmp.eq.s32.totalorder %s16, 5
      %p150 = por %p148, %p149
      %p151 = scmp.ne.s32.totalorder %s143, %s146
      %p152 = scmp.eq.s32.totalorder %s16, 0
      %p153 = por %p151, %p152
      %p154 = scmp.ne.s32.totalorder %s143, %s146
      %p155 = scmp.eq.s32.totalorder %s21, 5
      %p156 = por %p154, %p155
      %p157 = scmp.ne.s32.totalorder %s146, %s147
      %p158 = scmp.eq.s32.totalorder %s21, 0
      %p159 = por %p157, %p158
      %p160 = scmp.ne.s32.totalorder %s146, %s147
      %p161 = scmp.eq.s32.totalorder %s22, 5
      %p162 = por %p160, %p161
      %p164 = scmp.ne.s32.totalorder %s147, %s163
      %p165 = scmp.eq.s32.totalorder %s22, 0
      %p166 = por %p164, %p165
      %s167 = ssub.s32 %s25, %s34
      %s168 = ssub.s32 %s23, %s42
      %s169 = sor.u32 %s167, %s168
      %s170 = ssub.s32 %s24, %s38
      %s171 = sor.u32 %s169, %s170
      %p172 = scmp.eq.s32.totalorder %s171, 0
      %s174 = sadd.s32 %s173, 1
      %s175 = scalar_select %p172, %s173, %s174
      %p178 = pneg %p172
      %p179 = scmp.eq.s32.totalorder %s16, 5
      %p180 = por %p178, %p179
      %p181 = scmp.ne.s32.totalorder %s173, %s176
      %p182 = scmp.eq.s32.totalorder %s16, 0
      %p183 = por %p181, %p182
      %p184 = scmp.ne.s32.totalorder %s173, %s176
      %p185 = scmp.eq.s32.totalorder %s21, 5
      %p186 = por %p184, %p185
      %p187 = scmp.ne.s32.totalorder %s176, %s177
      %p188 = scmp.eq.s32.totalorder %s21, 0
      %p189 = por %p187, %p188
      %p190 = scmp.ne.s32.totalorder %s176, %s177
      %p191 = scmp.eq.s32.totalorder %s22, 5
      %p192 = por %p190, %p191
      %p194 = scmp.ne.s32.totalorder %s177, %s193
      %p195 = scmp.eq.s32.totalorder %s22, 0
      %p196 = por %p194, %p195
      %s197 = ssub.s32 %s25, %s34
      %s198 = ssub.s32 %s23, %s42
      %s199 = sor.u32 %s197, %s198
      %s200 = ssub.s32 %s24, %s38
      %s201 = sor.u32 %s199, %s200
      %p202 = scmp.eq.s32.totalorder %s201, 0
      %s204 = sadd.s32 %s203, 1
      %s205 = scalar_select %p202, %s203, %s204
      %p208 = pneg %p202
      %p209 = scmp.eq.s32.totalorder %s16, 5
      %p210 = por %p208, %p209
      %p211 = scmp.ne.s32.totalorder %s203, %s206
      %p212 = scmp.eq.s32.totalorder %s16, 0
      %p213 = por %p211, %p212
      %p214 = scmp.ne.s32.totalorder %s203, %s206
      %p215 = scmp.eq.s32.totalorder %s21, 5
      %p216 = por %p214, %p215
      %p217 = scmp.ne.s32.totalorder %s206, %s207
      %p218 = scmp.eq.s32.totalorder %s21, 0
      %p219 = por %p217, %p218
      %p220 = scmp.ne.s32.totalorder %s206, %s207
      %p221 = scmp.eq.s32.totalorder %s22, 5
      %p222 = por %p220, %p221
      %p224 = scmp.ne.s32.totalorder %s207, %s223
      %p225 = scmp.eq.s32.totalorder %s22, 0
      %p226 = por %p224, %p225
      %s227 = ssub.s32 %s25, %s34
      %s228 = ssub.s32 %s23, %s42
      %s229 = sor.u32 %s227, %s228
      %s230 = ssub.s32 %s24, %s38
      %s231 = sor.u32 %s229, %s230
      %p232 = scmp.eq.s32.totalorder %s231, 0
      %s234 = sadd.s32 %s233, 1
      %s235 = scalar_select %p232, %s233, %s234
      %p238 = pneg %p232
      %p239 = scmp.eq.s32.totalorder %s16, 5
      %p240 = por %p238, %p239
      %p241 = scmp.ne.s32.totalorder %s233, %s236
      %p242 = scmp.eq.s32.totalorder %s16, 0
      %p243 = por %p241, %p242
      %p244 = scmp.ne.s32.totalorder %s233, %s236
      %p245 = scmp.eq.s32.totalorder %s21, 5
      %p246 = por %p244, %p245
      %p247 = scmp.ne.s32.totalorder %s236, %s237
      %p248 = scmp.eq.s32.totalorder %s21, 0
      %p249 = por %p247, %p248
      %p250 = scmp.ne.s32.totalorder %s236, %s237
      %p251 = scmp.eq.s32.totalorder %s22, 5
      %p252 = por %p250, %p251
      %p254 = scmp.ne.s32.totalorder %s237, %s253
      %p255 = scmp.eq.s32.totalorder %s22, 0
      %p256 = por %p254, %p255
      %p257 = scmp.le.s32.totalorder 1, %s16
      %p258 = scmp.lt.s32.totalorder %s16, 7
      %p259 = pnand %p257, %p258
      %p260 = pneg %p259
      // Predicated region
      $region9: #{_hologram_forward.3} parent=5 // pred_check
        _
      $region10: #{_hologram_forward.3} parent=5 // pred_check_branch
        %262 = sbr.rel (%p259) target = $region12
      $region11: #{_hologram_forward.3} parent=5 // pred_region
        %s263 = ssub.s32 %s16, 1
        // Predicated region
        $region13: #{_hologram_forward.3} parent=11 // pred_check
          %p264 = pneg %p56
        $region14: #{_hologram_forward.3} parent=11 // pred_check_branch
          %266 = sbr.rel (%p264) target = $region16
        $region15: #{_hologram_forward.3} parent=11 // pred_region
          %s268 = ssub.s32 16, 16
          %269 = vsyncadd [#allocation5], %s268
          %s271 = sshll.u32 %s0, 4
          %s272 = int_to_ptr.vmem [resolvable:$true] %s271
          %274 = dma.vmem_to_smem %s272, 16, [#allocation4], [#allocation5]
        $region16: #{_hologram_forward.3} parent=11 // pred_fallthru
          _
        // Predicated region
        $region17: #{_hologram_forward.3} parent=11 // pred_check
          %p275 = pneg %p77
        $region18: #{_hologram_forward.3} parent=11 // pred_check_branch
          %277 = sbr.rel (%p275) target = $region20
        $region19: #{_hologram_forward.3} parent=11 // pred_region
          %s279 = ssub.s32 16, 16
          %280 = vsyncadd [#allocation7], %s279
          %s282 = sshll.u32 %s1, 4
          %s283 = int_to_ptr.vmem [resolvable:$true] %s282
          %285 = dma.vmem_to_smem %s283, 16, [#allocation6], [#allocation7]
        $region20: #{_hologram_forward.3} parent=11 // pred_fallthru
          _
        // Predicated region
        $region21: #{_hologram_forward.3} parent=11 // pred_check
          %p286 = pneg %p103
        $region22: #{_hologram_forward.3} parent=11 // pred_check_branch
          %288 = sbr.rel (%p286) target = $region24
        $region23: #{_hologram_forward.3} parent=11 // pred_region
          %p289 = scmp.lt.s32.totalorder %s27, 0
          %s290 = scalar_select %p289, %s27, 0
          %s291 = smul.addr %s290, 2
          %s292 = scalar_lea.vmem %s2, %s291
        $region24: #{_hologram_forward.3} parent=11 // pred_fallthru
          _
        // Predicated region
        $region25: #{_hologram_forward.3} parent=11 // pred_check
          %p293 = pneg %p129
        $region26: #{_hologram_forward.3} parent=11 // pred_check_branch
          %295 = sbr.rel (%p293) target = $region28
        $region27: #{_hologram_forward.3} parent=11 // pred_region
          %p296 = scmp.lt.s32.totalorder %s27, 0
          %s297 = scalar_select %p296, %s27, 0
          %s298 = smul.addr %s297, 2
          %s299 = scalar_lea.vmem %s3, %s298
        $region28: #{_hologram_forward.3} parent=11 // pred_fallthru
          _
      $region12: #{_hologram_forward.3} parent=5 // pred_fallthru
        _
      %p300 = scmp.lt.s32.totalorder %s16, 6
      // Predicated region
      $region29: #{_hologram_forward.3} parent=5 // pred_check
        %p301 = pneg %p300
      $region30: #{_hologram_forward.3} parent=5 // pred_check_branch
        %303 = sbr.rel (%p301) target = $region32
      $region31: #{_hologram_forward.3} parent=5 // pred_region
        // Predicated region
        $region33: #{_hologram_forward.3} parent=31 // pred_check
          %p304 = pneg %p153
        $region34: #{_hologram_forward.3} parent=31 // pred_check_branch
          %306 = sbr.rel (%p304) target = $region36
        $region35: #{_hologram_forward.3} parent=31 // pred_region
          %p307 = scmp.lt.s32.totalorder %s25, 1
          %s308 = scalar_select %p307, %s25, 1
          %p309 = scmp.lt.s32.totalorder %s23, 2
          %s310 = scalar_select %p309, %s23, 2
          %p311 = scmp.lt.s32.totalorder %s24, 0
          %s312 = scalar_select %p311, %s24, 0
          %s313 = smul.addr %s312, 2
          %s314 = smul.addr %s310, 2
          %s315 = sadd.s32 %s313, %s314
          %s316 = smul.addr %s308, 6
          %s317 = sadd.s32 %s315, %s316
          %s318 = scalar_lea.vmem %s4, %s317
        $region36: #{_hologram_forward.3} parent=31 // pred_fallthru
          _
        // Predicated region
        $region37: #{_hologram_forward.3} parent=31 // pred_check
          %p319 = pneg %p183
        $region38: #{_hologram_forward.3} parent=31 // pred_check_branch
          %321 = sbr.rel (%p319) target = $region40
        $region39: #{_hologram_forward.3} parent=31 // pred_region
          %p322 = scmp.lt.s32.totalorder %s25, 1
          %s323 = scalar_select %p322, %s25, 1
          %p324 = scmp.lt.s32.totalorder %s23, 2
          %s325 = scalar_select %p324, %s23, 2
          %p326 = scmp.lt.s32.totalorder %s24, 0
          %s327 = scalar_select %p326, %s24, 0
          %s328 = smul.addr %s327, 2
          %s329 = smul.addr %s325, 2
          %s330 = sadd.s32 %s328, %s329
          %s331 = smul.addr %s323, 6
          %s332 = sadd.s32 %s330, %s331
          %s333 = scalar_lea.vmem %s5, %s332
        $region40: #{_hologram_forward.3} parent=31 // pred_fallthru
          _
      $region32: #{_hologram_forward.3} parent=5 // pred_fallthru
        _
      %p334 = scmp.le.s32.totalorder 1, %s16
      %p335 = scmp.lt.s32.totalorder %s16, 7
      %p336 = pnand %p334, %p335
      %p337 = pneg %p336
      // Predicated region
      $region41: #{_hologram_forward.3} parent=5 // pred_check
        _
      $region42: #{_hologram_forward.3} parent=5 // pred_check_branch
        %339 = sbr.rel (%p336) target = $region44
      $region43: #{_hologram_forward.3} parent=5 // pred_region
        %s340 = ssub.s32 %s16, 1
        // Predicated region
        $region45: #{_hologram_forward.3} parent=43 // pred_check
          %p341 = pneg %p56
        $region46: #{_hologram_forward.3} parent=43 // pred_check_branch
          %343 = sbr.rel (%p341) target = $region48
        $region47: #{_hologram_forward.3} parent=43 // pred_region
          %344 = dma.done [#allocation5], 16
        $region48: #{_hologram_forward.3} parent=43 // pred_fallthru
          _
        // Predicated region
        $region49: #{_hologram_forward.3} parent=43 // pred_check
          %p345 = pneg %p77
        $region50: #{_hologram_forward.3} parent=43 // pred_check_branch
          %347 = sbr.rel (%p345) target = $region52
        $region51: #{_hologram_forward.3} parent=43 // pred_region
          %348 = dma.done [#allocation7], 16
        $region52: #{_hologram_forward.3} parent=43 // pred_fallthru
          _
        %349 = sfence
        %p350 = pneg %p56
        %p351 = pneg %p53
        %p352 = pneg %p77
        %p353 = pneg %p74
        %p354 = scmp.lt.s32.totalorder %s27, 0
        %s355 = scalar_select %p354, %s27, 0
        %s356 = smul.addr %s355, 2
        %s357 = scalar_lea.vmem %s2, %s356
        %p358 = pneg %p103
        %p359 = pneg %p100
        %p360 = scmp.lt.s32.totalorder %s27, 0
        %s361 = scalar_select %p360, %s27, 0
        %s362 = smul.addr %s361, 2
        %s363 = scalar_lea.vmem %s3, %s362
        %p364 = pneg %p129
        %p365 = pneg %p126
        %p366 = scmp.lt.s32.totalorder %s28, 1
        %s367 = scalar_select %p366, %s28, 1
        %p368 = scmp.lt.s32.totalorder %s26, 2
        %s369 = scalar_select %p368, %s26, 2
        %p370 = scmp.lt.s32.totalorder %s27, 0
        %s371 = scalar_select %p370, %s27, 0
        %s372 = smul.addr %s371, 2
        %s373 = smul.addr %s369, 2
        %s374 = sadd.s32 %s372, %s373
        %s375 = smul.addr %s367, 6
        %s376 = sadd.s32 %s374, %s375
        %s377 = scalar_lea.vmem %s4, %s376
        %p378 = pneg %p159
        %p379 = pneg %p156
        %p380 = scmp.lt.s32.totalorder %s28, 1
        %s381 = scalar_select %p380, %s28, 1
        %p382 = scmp.lt.s32.totalorder %s26, 2
        %s383 = scalar_select %p382, %s26, 2
        %p384 = scmp.lt.s32.totalorder %s27, 0
        %s385 = scalar_select %p384, %s27, 0
        %s386 = smul.addr %s385, 2
        %s387 = smul.addr %s383, 2
        %s388 = sadd.s32 %s386, %s387
        %s389 = smul.addr %s381, 6
        %s390 = sadd.s32 %s388, %s389
        %s391 = scalar_lea.vmem %s5, %s390
        %p392 = pneg %p189
        %p393 = pneg %p186
        %p394 = pneg %p219
        %p395 = pneg %p216
        %p396 = scmp.lt.s32.totalorder %s28, 1
        %s397 = scalar_select %p396, %s28, 1
        %p398 = scmp.lt.s32.totalorder %s26, 2
        %s399 = scalar_select %p398, %s26, 2
        %p400 = scmp.lt.s32.totalorder %s27, 0
        %s401 = scalar_select %p400, %s27, 0
        %s402 = smul.addr %s401, 2
        %s403 = smul.addr %s399, 2
        %s404 = sadd.s32 %s402, %s403
        %s405 = smul.addr %s397, 6
        %s406 = sadd.s32 %s404, %s405
        %s407 = scalar_lea.vmem %s6, %s406
        %p408 = pneg %p249
        %p409 = pneg %p246
        %p410 = scmp.lt.s32.totalorder %s28, 1
        %s411 = scalar_select %p410, %s28, 1
        %p412 = scmp.lt.s32.totalorder %s26, 2
        %s413 = scalar_select %p412, %s26, 2
        %p414 = scmp.lt.s32.totalorder %s27, 0
        %s415 = scalar_select %p414, %s27, 0
        %s416 = smul.addr %s415, 2
        %s417 = smul.addr %s413, 2
        %s418 = sadd.s32 %s416, %s417
        %s419 = smul.addr %s411, 6
        %s420 = sadd.s32 %s418, %s419
        %s421 = scalar_lea.vmem %s7, %s420
        %p422 = scmp.lt.s32.totalorder %s27, 0
        %s423 = scalar_select %p422, %s27, 0
        %s424 = smul.addr %s423, 2
        %s425 = scalar_lea.vmem %s2, %s424
        %p426 = scmp.lt.s32.totalorder %s27, 0
        %s427 = scalar_select %p426, %s27, 0
        %s428 = smul.addr %s427, 2
        %s429 = scalar_lea.vmem %s3, %s428
        %p430 = scmp.lt.s32.totalorder %s28, 1
        %s431 = scalar_select %p430, %s28, 1
        %p432 = scmp.lt.s32.totalorder %s26, 2
        %s433 = scalar_select %p432, %s26, 2
        %p434 = scmp.lt.s32.totalorder %s27, 0
        %s435 = scalar_select %p434, %s27, 0
        %s436 = smul.addr %s435, 2
        %s437 = smul.addr %s433, 2
        %s438 = sadd.s32 %s436, %s437
        %s439 = smul.addr %s431, 6
        %s440 = sadd.s32 %s438, %s439
        %s441 = scalar_lea.vmem %s4, %s440
        %p442 = scmp.lt.s32.totalorder %s28, 1
        %s443 = scalar_select %p442, %s28, 1
        %p444 = scmp.lt.s32.totalorder %s26, 2
        %s445 = scalar_select %p444, %s26, 2
        %p446 = scmp.lt.s32.totalorder %s27, 0
        %s447 = scalar_select %p446, %s27, 0
        %s448 = smul.addr %s447, 2
        %s449 = smul.addr %s445, 2
        %s450 = sadd.s32 %s448, %s449
        %s451 = smul.addr %s443, 6
        %s452 = sadd.s32 %s450, %s451
        %s453 = scalar_lea.vmem %s5, %s452
        %p454 = scmp.lt.s32.totalorder %s28, 1
        %s455 = scalar_select %p454, %s28, 1
        %p456 = scmp.lt.s32.totalorder %s26, 2
        %s457 = scalar_select %p456, %s26, 2
        %p458 = scmp.lt.s32.totalorder %s27, 0
        %s459 = scalar_select %p458, %s27, 0
        %s460 = smul.addr %s459, 2
        %s461 = smul.addr %s457, 2
        %s462 = sadd.s32 %s460, %s461
        %s463 = smul.addr %s455, 6
        %s464 = sadd.s32 %s462, %s463
        %s465 = scalar_lea.vmem %s6, %s464
        %p466 = scmp.lt.s32.totalorder %s28, 1
        %s467 = scalar_select %p466, %s28, 1
        %p468 = scmp.lt.s32.totalorder %s26, 2
        %s469 = scalar_select %p468, %s26, 2
        %p470 = scmp.lt.s32.totalorder %s27, 0
        %s471 = scalar_select %p470, %s27, 0
        %s472 = smul.addr %s471, 2
        %s473 = smul.addr %s469, 2
        %s474 = sadd.s32 %s472, %s473
        %s475 = smul.addr %s467, 6
        %s476 = sadd.s32 %s474, %s475
        %s477 = scalar_lea.vmem %s7, %s476
        %s478 = sld [smem:[#allocation4 + %s26]]
        %p479 = scmp.eq.s32.totalorder %s28, 0
        // Predicated region
        $region53: #{_hologram_forward.3} parent=43 // pred_check
          %p480 = pneg %p479
        $region54: #{_hologram_forward.3} parent=43 // pred_check_branch
          %482 = sbr.rel (%p480) target = $region56
        $region55: #{_hologram_forward.3} parent=43 // pred_region
          %v483 = vstv %s478
          %v484 = vrcp.pop %v483
          %s485 = vtos %v484
          %s486 = smul.f32 6.2831855, %s485
          %s487 = sld [smem:[#allocation6]]
          %s488 = sld [smem:[#allocation6 + $0x1]]
          %s489 = sld [smem:[#allocation6 + $0x2]]
          %v490 = vld [vmem:[%s425] sm:$0x3]
          %v491 = vstv %s489
          %v492 = vadd.f32 %v490, %v491
          %s493 = smul.f32 %s486, -0.5
          %v494 = vstv %s493
          %v495 = vmul.f32 %v494, %v492
          %v496 = vstv %s488
          %v497 = vmul.f32 %v495, %v496
          %v498 = vstv %s487
          %v499 = vmul.f32 %v497, %v498
          %v500 = vmul.f32 %v499, 1.442695
          %v501 = vpow.pop %v500
          %v502 = vstv %s486
          %v503 = vmul.f32 %v502, %v492
          %s504 = ssub.f32 %s487, 1.0
          %v505 = vstv %s504
          %v506 = vmul.f32 %v503, %v505
          %v507 = vld [vmem:[%s429] sm:$0x3]
          %v508 = vmul.f32 %v507, %v501
          %v509 = vand.u32 2147483647, %v506
          %vm510 = vcmp.le.f32.partialorder %v509, 0.7853982
          %vm511 = vcmp.lt.s32.totalorder %v506, 0
          %v512 = vand.u32 %v506, 2139095040
          %v513 = vshrl.u32 %v512, 23
          %v514 = vsub.s32 %v513, 127
          %v515 = vand.u32 2147483647, %v506
          %v516 = vand.u32 %v515, 8388607
          %v517 = vor.u32 %v516, 8388608
          %v518 = vsub.s32 0, %v517
          %v519 = vadd.s32 %v514, 1
          %vm520 = vcmp.gt.s32.totalorder %v519, 0
          %v521 = vsel %vm520, %v519, 0
          %v522 = vshrl.u32 %v521, 5
          %v523 = vand.u32 %v521, 31
          %v524 = vsub.s32 32, %v523
          %v525 = vshrl.u32 683565275, %v524
          %v526 = vshll.u32 683565275, %v523
          %v527 = vshrl.u32 2475754826, %v524
          %v528 = vor.u32 %v526, %v527
          %v529 = vshll.u32 2475754826, %v523
          %v530 = vshrl.u32 2131351028, %v524
          %v531 = vor.u32 %v529, %v530
          %v532 = vshll.u32 2131351028, %v523
          %v533 = vshrl.u32 2102212464, %v524
          %v534 = vor.u32 %v532, %v533
          %v535 = vshll.u32 2102212464, %v523
          %v536 = vshrl.u32 920167782, %v524
          %v537 = vor.u32 %v535, %v536
          %v538 = vshll.u32 920167782, %v523
          %v539 = vshrl.u32 1326507024, %v524
          %v540 = vor.u32 %v538, %v539
          %vm541 = vcmp.lt.s32.totalorder %v522, 1
          %vm542 = vcmp.lt.s32.totalorder %v522, 2
          %vm543 = vcmp.lt.s32.totalorder %v522, 3
          %vm544 = vcmp.lt.s32.totalorder %v522, 4
          %v545 = vsel %vm541, %v525, %v528
          %v546 = vsel %vm544, %v534, 2102212464
          %v547 = vsel %vm543, %v531, %v546
          %v548 = vsel %vm542, %v545, %v547
          %v549 = vsel %vm541, %v528, %v531
          %v550 = vsel %vm544, %v537, 920167782
          %v551 = vsel %vm543, %v534, %v550
          %v552 = vsel %vm542, %v549, %v551
          %v553 = vsel %vm541, %v531, %v534
          %v554 = vsel %vm544, %v540, 1326507024
          %v555 = vsel %vm543, %v537, %v554
          %v556 = vsel %vm542, %v553, %v555
          %v557 = vshll.u32 %v517, 8
          %v558 = vmul.u32.u64.compose %v557, %v556
          %v559 = vextract.low.u32 %v558
          %v560 = vextract.high.u32 %v558
          %v561 = vmul.u32.u64.compose %v557, %v552
          %v562 = vextract.low.u32 %v561
          %v563 = vextract.high.u32 %v561
          %v564 = vmul.u32 %v557, %v548
          %v565 = vadd.s32 %v560, %v562
          %vm566 = vc.u32 %v560, %v562
          %v567 = vadd.s32 %v563, 1
          %v568 = vsel %vm566, %v567, %v563
          %v569 = vadd.s32 %v564, %v568
          %v570 = vadd.s32 %v569, 536870912
          %v571 = vshrl.u32 %v570, 30
          %v572 = vshll.u32 %v571, 30
          %v573 = vsub.s32 %v569, %v572
          %vm574 = vcmp.lt.s32.totalorder %v573, 0
          %v575 = vsub.s32 0, %v573
          %v576 = vsel %vm574, %v575, %v573
          %v577 = vclz %v576
          %v578 = vsub.s32 %v577, 2
          %vm579 = vcmp.gt.s32.totalorder 0, %v578
          %v580 = vsel %vm579, 0, %v578
          %v581 = vsub.s32 32, %v580
          %v582 = vshll.u32 %v573, %v580
          %v583 = vshrl.u32 %v565, %v581
          %v584 = vor.u32 %v582, %v583
          %v585 = vsub.s32 4294967266, %v580
          %v586 = vadd.s32 %v585, 127
          %v587 = vshll.u32 %v586, 23
          %v588 = vor.u32 4788187, %v587
          %v589 = vand.u32 2147483647, %v588
          %v591 = vcvt.s32.f32 %v584
          %v592 = vmul.f32 %v591, %v589
          %v593 = vxor.u32 %v592, 2147483648
          %v594 = vsel %vm511, %v593, %v592
          %v595 = vsub.s32 4, %v571
          %v596 = vsel %vm511, %v595, %v571
          %v597 = vsel %vm510, %v506, %v594
          %v598 = vsel %vm510, 0, %v596
          %v599 = vcosq.f32.pop %v597
          %v600 = vsinq.f32.pop %v597
          %vm601 = vweird.f32 %v506
          %v602 = vand.u32 %v598, 3
          %vm603 = vcmp.lt.s32.totalorder %v602, 2
          %vm604 = vcmp.eq.s32.totalorder %v602, 0
          %v605 = vxor.u32 %v600, 2147483648
          %v606 = vsel %vm604, %v599, %v605
          %vm607 = vcmp.eq.s32.totalorder %v602, 2
          %v608 = vxor.u32 %v599, 2147483648
          %v609 = vsel %vm607, %v608, %v600
          %v610 = vsel %vm603, %v606, %v609
          %v611 = vsel %vm601, nan, %v610
          %v612 = vmul.f32 %v508, %v611
          %v613 = vlaneseq
          %vm614 = vcmp.ge.s32.totalorder %v613, 0
          %vm615 = vcmp.lt.s32.totalorder %v613, 256
          %vm616 = vmand %vm614, %vm615
          %617 = vst.msk [vmem:[#allocation2] sm:$0x3] %vm616, %v612
          %v618 = vsub.f32 0.0, %v508
          %v619 = vand.u32 2147483647, %v506
          %vm620 = vcmp.le.f32.partialorder %v619, 0.7853982
          %vm621 = vcmp.lt.s32.totalorder %v506, 0
          %v622 = vand.u32 %v506, 2139095040
          %v623 = vshrl.u32 %v622, 23
          %v624 = vsub.s32 %v623, 127
          %v625 = vand.u32 2147483647, %v506
          %v626 = vand.u32 %v625, 8388607
          %v627 = vor.u32 %v626, 8388608
          %v628 = vsub.s32 0, %v627
          %v629 = vadd.s32 %v624, 1
          %vm630 = vcmp.gt.s32.totalorder %v629, 0
          %v631 = vsel %vm630, %v629, 0
          %v632 = vshrl.u32 %v631, 5
          %v633 = vand.u32 %v631, 31
          %v634 = vsub.s32 32, %v633
          %v635 = vshrl.u32 683565275, %v634
          %v636 = vshll.u32 683565275, %v633
          %v637 = vshrl.u32 2475754826, %v634
          %v638 = vor.u32 %v636, %v637
          %v639 = vshll.u32 2475754826, %v633
          %v640 = vshrl.u32 2131351028, %v634
          %v641 = vor.u32 %v639, %v640
          %v642 = vshll.u32 2131351028, %v633
          %v643 = vshrl.u32 2102212464, %v634
          %v644 = vor.u32 %v642, %v643
          %v645 = vshll.u32 2102212464, %v633
          %v646 = vshrl.u32 920167782, %v634
          %v647 = vor.u32 %v645, %v646
          %v648 = vshll.u32 920167782, %v633
          %v649 = vshrl.u32 1326507024, %v634
          %v650 = vor.u32 %v648, %v649
          %vm651 = vcmp.lt.s32.totalorder %v632, 1
          %vm652 = vcmp.lt.s32.totalorder %v632, 2
          %vm653 = vcmp.lt.s32.totalorder %v632, 3
          %vm654 = vcmp.lt.s32.totalorder %v632, 4
          %v655 = vsel %vm651, %v635, %v638
          %v656 = vsel %vm654, %v644, 2102212464
          %v657 = vsel %vm653, %v641, %v656
          %v658 = vsel %vm652, %v655, %v657
          %v659 = vsel %vm651, %v638, %v641
          %v660 = vsel %vm654, %v647, 920167782
          %v661 = vsel %vm653, %v644, %v660
          %v662 = vsel %vm652, %v659, %v661
          %v663 = vsel %vm651, %v641, %v644
          %v664 = vsel %vm654, %v650, 1326507024
          %v665 = vsel %vm653, %v647, %v664
          %v666 = vsel %vm652, %v663, %v665
          %v667 = vshll.u32 %v627, 8
          %v668 = vmul.u32.u64.compose %v667, %v666
          %v669 = vextract.low.u32 %v668
          %v670 = vextract.high.u32 %v668
          %v671 = vmul.u32.u64.compose %v667, %v662
          %v672 = vextract.low.u32 %v671
          %v673 = vextract.high.u32 %v671
          %v674 = vmul.u32 %v667, %v658
          %v675 = vadd.s32 %v670, %v672
          %vm676 = vc.u32 %v670, %v672
          %v677 = vadd.s32 %v673, 1
          %v678 = vsel %vm676, %v677, %v673
          %v679 = vadd.s32 %v674, %v678
          %v680 = vadd.s32 %v679, 536870912
          %v681 = vshrl.u32 %v680, 30
          %v682 = vshll.u32 %v681, 30
          %v683 = vsub.s32 %v679, %v682
          %vm684 = vcmp.lt.s32.totalorder %v683, 0
          %v685 = vsub.s32 0, %v683
          %v686 = vsel %vm684, %v685, %v683
          %v687 = vclz %v686
          %v688 = vsub.s32 %v687, 2
          %vm689 = vcmp.gt.s32.totalorder 0, %v688
          %v690 = vsel %vm689, 0, %v688
          %v691 = vsub.s32 32, %v690
          %v692 = vshll.u32 %v683, %v690
          %v693 = vshrl.u32 %v675, %v691
          %v694 = vor.u32 %v692, %v693
          %v695 = vsub.s32 4294967266, %v690
          %v696 = vadd.s32 %v695, 127
          %v697 = vshll.u32 %v696, 23
          %v698 = vor.u32 4788187, %v697
          %v699 = vand.u32 2147483647, %v698
          %v701 = vcvt.s32.f32 %v694
          %v702 = vmul.f32 %v701, %v699
          %v703 = vxor.u32 %v702, 2147483648
          %v704 = vsel %vm621, %v703, %v702
          %v705 = vsub.s32 4, %v681
          %v706 = vsel %vm621, %v705, %v681
          %v707 = vsel %vm620, %v506, %v704
          %v708 = vsel %vm620, 0, %v706
          %v709 = vcosq.f32.pop %v707
          %v710 = vsinq.f32.pop %v707
          %vm711 = vweird.f32 %v506
          %v712 = vadd.s32 %v708, 3
          %v713 = vand.u32 %v712, 3
          %vm714 = vcmp.lt.s32.totalorder %v713, 2
          %vm715 = vcmp.eq.s32.totalorder %v713, 0
          %v716 = vxor.u32 %v710, 2147483648
          %v717 = vsel %vm715, %v709, %v716
          %vm718 = vcmp.eq.s32.totalorder %v713, 2
          %v719 = vxor.u32 %v709, 2147483648
          %v720 = vsel %vm718, %v719, %v710
          %v721 = vsel %vm714, %v717, %v720
          %v722 = vsel %vm711, nan, %v721
          %v723 = vmul.f32 %v618, %v722
          %724 = vst.msk [vmem:[#allocation3] sm:$0x3] %vm616, %v723
        $region56: #{_hologram_forward.3} parent=43 // pred_fallthru
          _
        %v725 = vld [vmem:[#allocation2] sm:$0x3]
        %v726 = vld [vmem:[#allocation3] sm:$0x3]
        %v727 = vld [vmem:[%s441] sm:$0x3]
        %v728 = vld [vmem:[%s453] sm:$0x3]
        %v729 = vmul.f32 %v727, %v725
        %v730 = vmul.f32 %v728, %v726
        %v731 = vsub.f32 %v729, %v730
        %v732 = vlaneseq
        %vm733 = vcmp.ge.s32.totalorder %v732, 0
        %vm734 = vcmp.lt.s32.totalorder %v732, 256
        %vm735 = vmand %vm733, %vm734
        %736 = vst.msk [vmem:[%s465] sm:$0x3] %vm735, %v731
        %v737 = vmul.f32 %v727, %v726
        %v738 = vmul.f32 %v728, %v725
        %v739 = vadd.f32 %v737, %v738
        %740 = vst.msk [vmem:[%s477] sm:$0x3] %vm735, %v739
        %p741 = scmp.lt.s32.totalorder %s28, 1
        %s742 = scalar_select %p741, %s28, 1
        %p743 = scmp.lt.s32.totalorder %s26, 2
        %s744 = scalar_select %p743, %s26, 2
        %p745 = scmp.lt.s32.totalorder %s27, 0
        %s746 = scalar_select %p745, %s27, 0
        %s747 = smul.addr %s746, 2
        %s748 = smul.addr %s744, 2
        %s749 = sadd.s32 %s747, %s748
        %s750 = smul.addr %s742, 6
        %s751 = sadd.s32 %s749, %s750
        %s752 = scalar_lea.vmem %s6, %s751
        %p753 = scmp.lt.s32.totalorder %s28, 1
        %s754 = scalar_select %p753, %s28, 1
        %p755 = scmp.lt.s32.totalorder %s26, 2
        %s756 = scalar_select %p755, %s26, 2
        %p757 = scmp.lt.s32.totalorder %s27, 0
        %s758 = scalar_select %p757, %s27, 0
        %s759 = smul.addr %s758, 2
        %s760 = smul.addr %s756, 2
        %s761 = sadd.s32 %s759, %s760
        %s762 = smul.addr %s754, 6
        %s763 = sadd.s32 %s761, %s762
        %s764 = scalar_lea.vmem %s7, %s763
        // Predicated region
        $region57: #{_hologram_forward.3} parent=43 // pred_check
          %p765 = pneg %p216
        $region58: #{_hologram_forward.3} parent=43 // pred_check_branch
          %767 = sbr.rel (%p765) target = $region60
        $region59: #{_hologram_forward.3} parent=43 // pred_region
          _
        $region60: #{_hologram_forward.3} parent=43 // pred_fallthru
          _
        // Predicated region
        $region61: #{_hologram_forward.3} parent=43 // pred_check
          %p768 = pneg %p246
        $region62: #{_hologram_forward.3} parent=43 // pred_check_branch
          %770 = sbr.rel (%p768) target = $region64
        $region63: #{_hologram_forward.3} parent=43 // pred_region
          _
        $region64: #{_hologram_forward.3} parent=43 // pred_fallthru
          _
      $region44: #{_hologram_forward.3} parent=5 // pred_fallthru
        _
      %p771 = scmp.le.s32.totalorder 2, %s16
      // Predicated region
      $region65: #{_hologram_forward.3} parent=5 // pred_check
        %p772 = pneg %p771
      $region66: #{_hologram_forward.3} parent=5 // pred_check_branch
        %774 = sbr.rel (%p772) target = $region68
      $region67: #{_hologram_forward.3} parent=5 // pred_region
        %s775 = ssub.s32 %s16, 2
        // Predicated region
        $region69: #{_hologram_forward.3} parent=67 // pred_check
          %p776 = pneg %p222
        $region70: #{_hologram_forward.3} parent=67 // pred_check_branch
          %778 = sbr.rel (%p776) target = $region72
        $region71: #{_hologram_forward.3} parent=67 // pred_region
          %p779 = scmp.lt.s32.totalorder %s31, 1
          %s780 = scalar_select %p779, %s31, 1
          %p781 = scmp.lt.s32.totalorder %s29, 2
          %s782 = scalar_select %p781, %s29, 2
          %p783 = scmp.lt.s32.totalorder %s30, 0
          %s784 = scalar_select %p783, %s30, 0
          %s785 = smul.addr %s784, 2
          %s786 = smul.addr %s782, 2
          %s787 = sadd.s32 %s785, %s786
          %s788 = smul.addr %s780, 6
          %s789 = sadd.s32 %s787, %s788
          %s790 = scalar_lea.vmem %s6, %s789
        $region72: #{_hologram_forward.3} parent=67 // pred_fallthru
          _
        // Predicated region
        $region73: #{_hologram_forward.3} parent=67 // pred_check
          %p791 = pneg %p252
        $region74: #{_hologram_forward.3} parent=67 // pred_check_branch
          %793 = sbr.rel (%p791) target = $region76
        $region75: #{_hologram_forward.3} parent=67 // pred_region
          %p794 = scmp.lt.s32.totalorder %s31, 1
          %s795 = scalar_select %p794, %s31, 1
          %p796 = scmp.lt.s32.totalorder %s29, 2
          %s797 = scalar_select %p796, %s29, 2
          %p798 = scmp.lt.s32.totalorder %s30, 0
          %s799 = scalar_select %p798, %s30, 0
          %s800 = smul.addr %s799, 2
          %s801 = smul.addr %s797, 2
          %s802 = sadd.s32 %s800, %s801
          %s803 = smul.addr %s795, 6
          %s804 = sadd.s32 %s802, %s803
          %s805 = scalar_lea.vmem %s7, %s804
        $region76: #{_hologram_forward.3} parent=67 // pred_fallthru
          _
      $region68: #{_hologram_forward.3} parent=5 // pred_fallthru
        _
    $region6: #{_hologram_forward.3} parent=1 // loop_footer
      %s20 = sadd.s32 1, %s16
    $region7: #{_hologram_forward.3} parent=1 // loop_footer_branch
      %15 = sbr.rel target = $region3
    $region8: #{_hologram_forward.3} parent=1 // loop_exit
      _
    %806 = vsyncpa [#allocation5], 1
    %s807 = scalar_lea.sflag [#allocation5], 1
    %808 = vsyncpa %s807, 1
    %809 = vsyncpa [#allocation7], 1

</llo_original>
